<compile_context>
chip_gen: v5e
topology: v5e:2x2
jax: 0.10.0
libtpu: 0.0.40
codegen_flags: <defaults>
</compile_context>

<pallas_src>
import jax
import jax.numpy as jnp
from jax.experimental import pallas as pl
from jax.experimental.pallas import tpu as pltpu


def _upsample_conv_kernel(xp_ref, w_ref, b_ref, o_ref):
    """One (batch, row-tile) grid step.

    xp_ref: (1, H+2, W+2, Cin)  zero-padded ORIGINAL input (resident per batch element)
    w_ref : (9*Cin, Npad)       phase-folded weights, Npad = round_up(4*Cout, 128)
    b_ref : (1, Npad)           bias tiled over the 4 phases (zero lane padding)
    o_ref : (1, TH, W, Npad)    per source pixel: (py, px, cout) phase outputs, lane padded
    """
    _, TH, W, Npad = o_ref.shape
    Cin = xp_ref.shape[3]

    t = pl.program_id(1)
    row0 = pl.multiple_of(t * TH, TH)   # top row (padded coords) of this tile's halo window

    acc = jnp.zeros((TH * W, Npad), dtype=jnp.float32)
    # 3x3 neighborhood of the padded ORIGINAL input. All 4 output phases fall out of one
    # wide, lane-dense contraction with the phase-folded weight matrix (im2col-in-K layout;
    # taps are contracted one Cin-slab at a time to avoid a lane-granularity gather at
    # small Cin -- each product already has the full Npad>=128 output width).
    for a in range(3):
        for b in range(3):
            tap = xp_ref[0, pl.ds(row0 + a, TH), pl.ds(b, W), :]      # (TH, W, Cin)
            k0 = (3 * a + b) * Cin
            acc += jnp.dot(tap.reshape(TH * W, Cin), w_ref[k0:k0 + Cin, :],
                           preferred_element_type=jnp.float32)

    acc += b_ref[...]
    o_ref[0] = acc.reshape(TH, W, Npad).astype(o_ref.dtype)


def _fold_weights(w_oihw, bias, compute_dtype):
    """Fold nearest-x2 upsample + 3x3 conv into one (9*Cin, Npad) matrix on the original grid."""
    Cout, Cin, KH, KW = w_oihw.shape
    assert KH == 3 and KW == 3, "UpsamplingBlock uses kernel_size=3, padding=1"
    # R[phase, tap, dy]: which original-kernel rows (dy) fold into each effective tap of the
    # per-phase 2-tap conv on the zero-padded ORIGINAL input (same matrix reused for columns).
    R = jnp.array([[[1., 0., 0.],
                    [0., 1., 1.],
                    [0., 0., 0.]],
                   [[0., 0., 0.],
                    [1., 1., 0.],
                    [0., 0., 1.]]], dtype=jnp.float32)
    # W_eff[a, b, c, py, px, o] = sum_{dy,dx} R[py,a,dy] * R[px,b,dx] * w[o,c,dy,dx]
    w_eff = jnp.einsum('pad,qbe,ocde->abcpqo', R, R, w_oihw.astype(jnp.float32))
    wm = w_eff.reshape(9 * Cin, 4 * Cout)

    npad = max(128, ((4 * Cout + 127) // 128) * 128)   # lane-dense output width
    wm = jnp.pad(wm, ((0, 0), (0, npad - 4 * Cout))).astype(compute_dtype)
    bm = jnp.pad(jnp.tile(bias.astype(jnp.float32), 4),
                 (0, npad - 4 * Cout)).reshape(1, npad)
    return wm, bm, npad


def upsampling_block(x_nchw, w_oihw, bias):
    """Equivalent of UpsamplingBlock.forward(x) for NCHW input."""
    N, Cin, H, W = x_nchw.shape
    Cout = w_oihw.shape[0]

    wm, bm, npad = _fold_weights(w_oihw, bias, x_nchw.dtype)

    # Small glue: NCHW -> NHWC and a 1-pixel zero pad of the ORIGINAL (not upsampled) input.
    x_nhwc = jnp.transpose(x_nchw, (0, 2, 3, 1))
    xp = jnp.pad(x_nhwc, ((0, 0), (1, 1), (1, 1), (0, 0)))

    # Row tile: keeps the (TH, W, Npad) output block modest so BlockSpec double-buffering has
    # something to overlap, and bounds per-step VMEM for 64 MiB (v7x) parts.
    TH = 8 if (H % 8 == 0 and H > 8) else H
    grid = (N, H // TH)

    out_phases = pl.pallas_call(
        _upsample_conv_kernel,
        out_shape=jax.ShapeDtypeStruct((N, H, W, npad), x_nchw.dtype),
        grid_spec=pltpu.PrefetchScalarGridSpec(
            num_scalar_prefetch=0,
            grid=grid,
            in_specs=[
                # Whole padded image per batch element; index map is constant in t so it is
                # DMA'd once per n and stays resident while the row tiles stream out.
                pl.BlockSpec((1, H + 2, W + 2, Cin), lambda n, t: (n, 0, 0, 0)),
                pl.BlockSpec((9 * Cin, npad), lambda n, t: (0, 0)),
                pl.BlockSpec((1, npad), lambda n, t: (0, 0)),
            ],
            out_specs=pl.BlockSpec((1, TH, W, npad), lambda n, t: (n, t, 0, 0)),
        ),
        compiler_params=pltpu.CompilerParams(
            dimension_semantics=("parallel", "arbitrary"),
            vmem_limit_bytes=64 * 1024 * 1024,
        ),
    )(xp, wm, bm)

    # Wrapper-side layout plumbing: drop the lane padding, interleave the 4 phases into the
    # 2H x 2W grid, and return NCHW to match the PyTorch module.
    y = out_phases[..., :4 * Cout].reshape(N, H, W, 2, 2, Cout)      # (n, y, x, py, px, o)
    y = y.transpose(0, 1, 3, 2, 4, 5).reshape(N, 2 * H, 2 * W, Cout)  # NHWC, upsampled
    return y.transpose(0, 3, 1, 2)                                    # NCHW


def reference(x_nchw, w_oihw, bias):
    """Pure-JAX reference (nearest upsample x2 + conv2d, pad=1) for validation."""
    up = jnp.repeat(jnp.repeat(x_nchw, 2, axis=2), 2, axis=3)
    out = jax.lax.conv_general_dilated(
        up, w_oihw, window_strides=(1, 1), padding=((1, 1), (1, 1)),
        dimension_numbers=("NCHW", "OIHW", "NCHW"))
    return out + bias[None, :, None, None]


if __name__ == "__main__":
    N, Cin, Cout, H, W = 2, 4, 8, 16, 16
    ksize = 3

    key = jax.random.PRNGKey(0)
    kx, kw, kb = jax.random.split(key, 3)

    x = jax.random.normal(kx, (N, Cin, H, W), dtype=jnp.float32)
    # Deterministic synthetic conv parameters (PyTorch shapes: (Cout, Cin, 3, 3), (Cout,))
    fan_in = Cin * ksize * ksize
    w = jax.random.uniform(kw, (Cout, Cin, ksize, ksize), dtype=jnp.float32,
                           minval=-1.0, maxval=1.0) / jnp.sqrt(fan_in)
    b = jax.random.uniform(kb, (Cout,), dtype=jnp.float32,
                           minval=-1.0, maxval=1.0) / jnp.sqrt(fan_in)

    out = upsampling_block(x, w, b)
    out = jax.block_until_ready(out)

    ref = jax.block_until_ready(reference(x, w, b))
    assert out.shape == (N, Cout, 2 * H, 2 * W), out.shape
    assert jnp.allclose(out, ref, atol=1e-5, rtol=1e-5), \
        f"max abs err {jnp.max(jnp.abs(out - ref))}"

    print("KERNEL_OK")
</pallas_src>

<mosaic_0001>
module attributes {stable_mosaic.version = 11 : i64} {
  func.func @_upsample_conv_kernel(%arg0: i32, %arg1: i32, %arg2: memref<1x18x18x4xf32, #tpu.memory_space<vmem>>, %arg3: memref<36x128xf32, #tpu.memory_space<vmem>>, %arg4: memref<1x128xf32, #tpu.memory_space<vmem>>, %arg5: memref<1x8x16x128xf32, #tpu.memory_space<vmem>>) attributes {dimension_semantics = [#tpu.dimension_semantics<parallel>, #tpu.dimension_semantics<arbitrary>], iteration_bounds = array<i64: 2, 2>, scalar_prefetch = 0 : i64, scratch_operands = 0 : i64, tpu.core_type = #tpu.core_type<tc>, window_params = [{transform_indices = @transform_0, window_bounds = array<i64: 1, 18, 18, 4>}, {pipeline_mode = #tpu.pipeline_mode<synchronous>, transform_indices = @transform_1, window_bounds = array<i64: 36, 128>}, {pipeline_mode = #tpu.pipeline_mode<synchronous>, transform_indices = @transform_2, window_bounds = array<i64: 1, 128>}, {transform_indices = @transform_3, window_bounds = array<i64: 1, 8, 16, 128>}]} {
    %c8_i32 = arith.constant 8 : i32
    %0 = arith.muli %arg1, %c8_i32 : i32
    %1 = tpu.assume_multiple %0, 8 : i32
    %cst = arith.constant 0.000000e+00 : f32
    %2 = vector.broadcast %cst : f32 to vector<128x128xf32>
    %c0_i32 = arith.constant 0 : i32
    %3 = arith.addi %1, %c0_i32 : i32
    %c0 = arith.constant 0 : index
    %4 = arith.index_cast %3 : i32 to index
    %c0_0 = arith.constant 0 : index
    %c0_1 = arith.constant 0 : index
    %5 = vector.load %arg2[%c0, %4, %c0_0, %c0_1] : memref<1x18x18x4xf32, #tpu.memory_space<vmem>>, vector<1x8x16x4xf32>
    %6 = vector.shape_cast %5 : vector<1x8x16x4xf32> to vector<8x16x4xf32>
    %7 = vector.shape_cast %6 : vector<8x16x4xf32> to vector<128x4xf32>
    %c0_2 = arith.constant 0 : index
    %c0_3 = arith.constant 0 : index
    %8 = vector.load %arg3[%c0_2, %c0_3] : memref<36x128xf32, #tpu.memory_space<vmem>>, vector<4x128xf32>
    %cst_4 = arith.constant dense<0.000000e+00> : vector<128x128xf32>
    %9 = tpu.matmul %7, %8, %cst_4 {dimension_numbers = #tpu.dot_dimension_numbers<[1], [0], [0], [1], [0, 0, 1, 1], [], []>} : vector<128x4xf32>, vector<4x128xf32>, vector<128x128xf32> -> vector<128x128xf32>
    %10 = arith.addf %2, %9 : vector<128x128xf32>
    %c0_i32_5 = arith.constant 0 : i32
    %11 = arith.addi %1, %c0_i32_5 : i32
    %c0_6 = arith.constant 0 : index
    %12 = arith.index_cast %11 : i32 to index
    %c1 = arith.constant 1 : index
    %c0_7 = arith.constant 0 : index
    %13 = vector.load %arg2[%c0_6, %12, %c1, %c0_7] : memref<1x18x18x4xf32, #tpu.memory_space<vmem>>, vector<1x8x16x4xf32>
    %14 = vector.shape_cast %13 : vector<1x8x16x4xf32> to vector<8x16x4xf32>
    %15 = vector.shape_cast %14 : vector<8x16x4xf32> to vector<128x4xf32>
    %c4 = arith.constant 4 : index
    %c0_8 = arith.constant 0 : index
    %16 = vector.load %arg3[%c4, %c0_8] : memref<36x128xf32, #tpu.memory_space<vmem>>, vector<4x128xf32>
    %cst_9 = arith.constant dense<0.000000e+00> : vector<128x128xf32>
    %17 = tpu.matmul %15, %16, %cst_9 {dimension_numbers = #tpu.dot_dimension_numbers<[1], [0], [0], [1], [0, 0, 1, 1], [], []>} : vector<128x4xf32>, vector<4x128xf32>, vector<128x128xf32> -> vector<128x128xf32>
    %18 = arith.addf %10, %17 : vector<128x128xf32>
    %c0_i32_10 = arith.constant 0 : i32
    %19 = arith.addi %1, %c0_i32_10 : i32
    %c0_11 = arith.constant 0 : index
    %20 = arith.index_cast %19 : i32 to index
    %c2 = arith.constant 2 : index
    %c0_12 = arith.constant 0 : index
    %21 = vector.load %arg2[%c0_11, %20, %c2, %c0_12] : memref<1x18x18x4xf32, #tpu.memory_space<vmem>>, vector<1x8x16x4xf32>
    %22 = vector.shape_cast %21 : vector<1x8x16x4xf32> to vector<8x16x4xf32>
    %23 = vector.shape_cast %22 : vector<8x16x4xf32> to vector<128x4xf32>
    %c8 = arith.constant 8 : index
    %c0_13 = arith.constant 0 : index
    %24 = vector.load %arg3[%c8, %c0_13] : memref<36x128xf32, #tpu.memory_space<vmem>>, vector<4x128xf32>
    %cst_14 = arith.constant dense<0.000000e+00> : vector<128x128xf32>
    %25 = tpu.matmul %23, %24, %cst_14 {dimension_numbers = #tpu.dot_dimension_numbers<[1], [0], [0], [1], [0, 0, 1, 1], [], []>} : vector<128x4xf32>, vector<4x128xf32>, vector<128x128xf32> -> vector<128x128xf32>
    %26 = arith.addf %18, %25 : vector<128x128xf32>
    %c1_i32 = arith.constant 1 : i32
    %27 = arith.addi %1, %c1_i32 : i32
    %c0_15 = arith.constant 0 : index
    %28 = arith.index_cast %27 : i32 to index
    %c0_16 = arith.constant 0 : index
    %c0_17 = arith.constant 0 : index
    %29 = vector.load %arg2[%c0_15, %28, %c0_16, %c0_17] : memref<1x18x18x4xf32, #tpu.memory_space<vmem>>, vector<1x8x16x4xf32>
    %30 = vector.shape_cast %29 : vector<1x8x16x4xf32> to vector<8x16x4xf32>
    %31 = vector.shape_cast %30 : vector<8x16x4xf32> to vector<128x4xf32>
    %c12 = arith.constant 12 : index
    %c0_18 = arith.constant 0 : index
    %32 = vector.load %arg3[%c12, %c0_18] : memref<36x128xf32, #tpu.memory_space<vmem>>, vector<4x128xf32>
    %cst_19 = arith.constant dense<0.000000e+00> : vector<128x128xf32>
    %33 = tpu.matmul %31, %32, %cst_19 {dimension_numbers = #tpu.dot_dimension_numbers<[1], [0], [0], [1], [0, 0, 1, 1], [], []>} : vector<128x4xf32>, vector<4x128xf32>, vector<128x128xf32> -> vector<128x128xf32>
    %34 = arith.addf %26, %33 : vector<128x128xf32>
    %c1_i32_20 = arith.constant 1 : i32
    %35 = arith.addi %1, %c1_i32_20 : i32
    %c0_21 = arith.constant 0 : index
    %36 = arith.index_cast %35 : i32 to index
    %c1_22 = arith.constant 1 : index
    %c0_23 = arith.constant 0 : index
    %37 = vector.load %arg2[%c0_21, %36, %c1_22, %c0_23] : memref<1x18x18x4xf32, #tpu.memory_space<vmem>>, vector<1x8x16x4xf32>
    %38 = vector.shape_cast %37 : vector<1x8x16x4xf32> to vector<8x16x4xf32>
    %39 = vector.shape_cast %38 : vector<8x16x4xf32> to vector<128x4xf32>
    %c16 = arith.constant 16 : index
    %c0_24 = arith.constant 0 : index
    %40 = vector.load %arg3[%c16, %c0_24] : memref<36x128xf32, #tpu.memory_space<vmem>>, vector<4x128xf32>
    %cst_25 = arith.constant dense<0.000000e+00> : vector<128x128xf32>
    %41 = tpu.matmul %39, %40, %cst_25 {dimension_numbers = #tpu.dot_dimension_numbers<[1], [0], [0], [1], [0, 0, 1, 1], [], []>} : vector<128x4xf32>, vector<4x128xf32>, vector<128x128xf32> -> vector<128x128xf32>
    %42 = arith.addf %34, %41 : vector<128x128xf32>
    %c1_i32_26 = arith.constant 1 : i32
    %43 = arith.addi %1, %c1_i32_26 : i32
    %c0_27 = arith.constant 0 : index
    %44 = arith.index_cast %43 : i32 to index
    %c2_28 = arith.constant 2 : index
    %c0_29 = arith.constant 0 : index
    %45 = vector.load %arg2[%c0_27, %44, %c2_28, %c0_29] : memref<1x18x18x4xf32, #tpu.memory_space<vmem>>, vector<1x8x16x4xf32>
    %46 = vector.shape_cast %45 : vector<1x8x16x4xf32> to vector<8x16x4xf32>
    %47 = vector.shape_cast %46 : vector<8x16x4xf32> to vector<128x4xf32>
    %c20 = arith.constant 20 : index
    %c0_30 = arith.constant 0 : index
    %48 = vector.load %arg3[%c20, %c0_30] : memref<36x128xf32, #tpu.memory_space<vmem>>, vector<4x128xf32>
    %cst_31 = arith.constant dense<0.000000e+00> : vector<128x128xf32>
    %49 = tpu.matmul %47, %48, %cst_31 {dimension_numbers = #tpu.dot_dimension_numbers<[1], [0], [0], [1], [0, 0, 1, 1], [], []>} : vector<128x4xf32>, vector<4x128xf32>, vector<128x128xf32> -> vector<128x128xf32>
    %50 = arith.addf %42, %49 : vector<128x128xf32>
    %c2_i32 = arith.constant 2 : i32
    %51 = arith.addi %1, %c2_i32 : i32
    %c0_32 = arith.constant 0 : index
    %52 = arith.index_cast %51 : i32 to index
    %c0_33 = arith.constant 0 : index
    %c0_34 = arith.constant 0 : index
    %53 = vector.load %arg2[%c0_32, %52, %c0_33, %c0_34] : memref<1x18x18x4xf32, #tpu.memory_space<vmem>>, vector<1x8x16x4xf32>
    %54 = vector.shape_cast %53 : vector<1x8x16x4xf32> to vector<8x16x4xf32>
    %55 = vector.shape_cast %54 : vector<8x16x4xf32> to vector<128x4xf32>
    %c24 = arith.constant 24 : index
    %c0_35 = arith.constant 0 : index
    %56 = vector.load %arg3[%c24, %c0_35] : memref<36x128xf32, #tpu.memory_space<vmem>>, vector<4x128xf32>
    %cst_36 = arith.constant dense<0.000000e+00> : vector<128x128xf32>
    %57 = tpu.matmul %55, %56, %cst_36 {dimension_numbers = #tpu.dot_dimension_numbers<[1], [0], [0], [1], [0, 0, 1, 1], [], []>} : vector<128x4xf32>, vector<4x128xf32>, vector<128x128xf32> -> vector<128x128xf32>
    %58 = arith.addf %50, %57 : vector<128x128xf32>
    %c2_i32_37 = arith.constant 2 : i32
    %59 = arith.addi %1, %c2_i32_37 : i32
    %c0_38 = arith.constant 0 : index
    %60 = arith.index_cast %59 : i32 to index
    %c1_39 = arith.constant 1 : index
    %c0_40 = arith.constant 0 : index
    %61 = vector.load %arg2[%c0_38, %60, %c1_39, %c0_40] : memref<1x18x18x4xf32, #tpu.memory_space<vmem>>, vector<1x8x16x4xf32>
    %62 = vector.shape_cast %61 : vector<1x8x16x4xf32> to vector<8x16x4xf32>
    %63 = vector.shape_cast %62 : vector<8x16x4xf32> to vector<128x4xf32>
    %c28 = arith.constant 28 : index
    %c0_41 = arith.constant 0 : index
    %64 = vector.load %arg3[%c28, %c0_41] : memref<36x128xf32, #tpu.memory_space<vmem>>, vector<4x128xf32>
    %cst_42 = arith.constant dense<0.000000e+00> : vector<128x128xf32>
    %65 = tpu.matmul %63, %64, %cst_42 {dimension_numbers = #tpu.dot_dimension_numbers<[1], [0], [0], [1], [0, 0, 1, 1], [], []>} : vector<128x4xf32>, vector<4x128xf32>, vector<128x128xf32> -> vector<128x128xf32>
    %66 = arith.addf %58, %65 : vector<128x128xf32>
    %c2_i32_43 = arith.constant 2 : i32
    %67 = arith.addi %1, %c2_i32_43 : i32
    %c0_44 = arith.constant 0 : index
    %68 = arith.index_cast %67 : i32 to index
    %c2_45 = arith.constant 2 : index
    %c0_46 = arith.constant 0 : index
    %69 = vector.load %arg2[%c0_44, %68, %c2_45, %c0_46] : memref<1x18x18x4xf32, #tpu.memory_space<vmem>>, vector<1x8x16x4xf32>
    %70 = vector.shape_cast %69 : vector<1x8x16x4xf32> to vector<8x16x4xf32>
    %71 = vector.shape_cast %70 : vector<8x16x4xf32> to vector<128x4xf32>
    %c32 = arith.constant 32 : index
    %c0_47 = arith.constant 0 : index
    %72 = vector.load %arg3[%c32, %c0_47] : memref<36x128xf32, #tpu.memory_space<vmem>>, vector<4x128xf32>
    %cst_48 = arith.constant dense<0.000000e+00> : vector<128x128xf32>
    %73 = tpu.matmul %71, %72, %cst_48 {dimension_numbers = #tpu.dot_dimension_numbers<[1], [0], [0], [1], [0, 0, 1, 1], [], []>} : vector<128x4xf32>, vector<4x128xf32>, vector<128x128xf32> -> vector<128x128xf32>
    %74 = arith.addf %66, %73 : vector<128x128xf32>
    %c0_49 = arith.constant 0 : index
    %c0_50 = arith.constant 0 : index
    %75 = vector.load %arg4[%c0_49, %c0_50] : memref<1x128xf32, #tpu.memory_space<vmem>>, vector<1x128xf32>
    %76 = vector.broadcast %75 : vector<1x128xf32> to vector<128x128xf32>
    %77 = arith.addf %74, %76 : vector<128x128xf32>
    %78 = vector.shape_cast %77 : vector<128x128xf32> to vector<8x16x128xf32>
    %c0_51 = arith.constant 0 : index
    %c0_52 = arith.constant 0 : index
    %c0_53 = arith.constant 0 : index
    %c0_54 = arith.constant 0 : index
    %79 = vector.load %arg5[%c0_51, %c0_52, %c0_53, %c0_54] : memref<1x8x16x128xf32, #tpu.memory_space<vmem>>, vector<1x8x16x128xf32>
    %80 = vector.shape_cast %79 : vector<1x8x16x128xf32> to vector<8x16x128xf32>
    %81 = vector.shape_cast %78 : vector<8x16x128xf32> to vector<1x8x16x128xf32>
    tpu.vector_store %arg5[%c0_51, %c0_52, %c0_53, %c0_54], %81 {strides = array<i32>} : memref<1x8x16x128xf32, #tpu.memory_space<vmem>>, vector<1x8x16x128xf32>,
    return
  }
  func.func @transform_0(%arg0: i32, %arg1: i32) -> (i32, i32, i32, i32) {
    %c0_i32 = arith.constant 0 : i32
    %c0_i32_0 = arith.constant 0 : i32
    %c0_i32_1 = arith.constant 0 : i32
    %c0_i32_2 = arith.constant 0 : i32
    return %arg0, %c0_i32, %c0_i32_0, %c0_i32_1 : i32, i32, i32, i32
  }
  func.func @transform_1(%arg0: i32, %arg1: i32) -> (i32, i32) {
    %c0_i32 = arith.constant 0 : i32
    %c0_i32_0 = arith.constant 0 : i32
    %c0_i32_1 = arith.constant 0 : i32
    return %c0_i32, %c0_i32_0 : i32, i32
  }
  func.func @transform_2(%arg0: i32, %arg1: i32) -> (i32, i32) {
    %c0_i32 = arith.constant 0 : i32
    %c0_i32_0 = arith.constant 0 : i32
    %c0_i32_1 = arith.constant 0 : i32
    return %c0_i32, %c0_i32_0 : i32, i32
  }
  func.func @transform_3(%arg0: i32, %arg1: i32) -> (i32, i32, i32, i32) {
    %c0_i32 = arith.constant 0 : i32
    %c0_i32_0 = arith.constant 0 : i32
    %c0_i32_1 = arith.constant 0 : i32
    return %arg0, %arg1, %c0_i32, %c0_i32_0 : i32, i32, i32, i32
  }
}

</mosaic_0001>

<llo_original>
// kernel: tpu_custom_call.1
$region0: #{tpu_custom_call.1}
  #allocation0 [shape = 'u32[]', space=smem, size = 0x4, offset = 0x4, fixed_abs, tag = 'smem constant byte address 0x4 - core index']
  #allocation1 [shape = 'u32[72,128]{1,0:T(1,128)}', space=vmem, size = 0x9000, scoped, tag = 'internal scratch']
  %s0 = inlined_call_operand.vmem [shape: f32[2,18,18,4], index: 0, kind: input, shape index: {}]
  %s1 = inlined_call_operand.vmem [shape: f32[36,128], index: 1, kind: input, shape index: {}]
  %s2 = inlined_call_operand.vmem [shape: f32[1,128], index: 2, kind: input, shape index: {}]
  %s3 = inlined_call_operand.hbm [shape: f32[2,16,16,128], index: 3, kind: output, shape index: {}]
  %s4 = sld [smem:[#allocation0]]
  $region45: #{tpu_custom_call.1} parent=0
    _
  %s6 = ssub.s32 1, %s4
  %s7 = scalar_select 0, %s6, %s4
  $region1: #{tpu_custom_call.1} parent=0
    #allocation2 [shape = 'u8[131072]{0}', space=vmem, size = 0x20000, scoped, tag = 'output window, operand 0']
    #allocation3 [shape = 's32[2]{0}', space=sflag, size = 0x8, scoped, tag = 'scoped memory for tpu_custom_call.1']
    %8 = vsyncpa [#allocation3], 0
    %s9 = scalar_lea.sflag [#allocation3], 1
    %10 = vsyncpa %s9, 0
    loop: start=0, step=1, limit=6
    $region2: #{tpu_custom_call.1} parent=1 // loop_pre_header
      _
    $region3: #{tpu_custom_call.1} parent=1 // loop_header
      %s12 = sphi 0, %s16
      %p13 = scmp.ge.s32.totalorder %s12, 6
      %s19 = sphi 0, %s31
      %s20 = sphi 0, %s27
      %s21 = sphi 0, %s19
      %s22 = sphi 0, %s20
      %s23 = sphi 0, %s21
      %s24 = sphi 0, %s22
      %s34 = sphi 0, %s36
      %s37 = sphi 0, %s34
      %s38 = sphi 0, %s37
      %s54 = sphi 0, %s38
      %s58 = sphi 0, %s58
      %s60 = sphi 0, %s58
      %s61 = sphi 0, %s60
      %s75 = sphi 0, %s61
      %s79 = sphi 0, %s79
      %s81 = sphi 0, %s79
      %s82 = sphi 0, %s81
      %s96 = sphi 0, %s82
      %s104 = sphi 0, %s106
      %s107 = sphi 0, %s104
      %s108 = sphi 0, %s107
      %s124 = sphi 0, %s108
    $region4: #{tpu_custom_call.1} parent=1 // loop_header_branch
      %15 = sbr.rel (%p13) target = $region8
    $region5: #{tpu_custom_call.1} parent=1 // loop_body
      %s17 = ssub.s32 %s12, 1
      %s18 = ssub.s32 %s12, 2
      %s25 = sadd.s32 1, %s20
      %p26 = scmp.ge.s32.totalorder %s25, 2
      %s27 = scalar_select %p26, 0, %s25
      %s28 = sadd.s32 1, %s19
      %s29 = scalar_select %p26, %s28, %s19
      %p30 = scmp.ge.s32.totalorder %s29, 2
      %s31 = scalar_select %p30, 0, %s29
      %s32 = ssub.s32 %s19, %s31
      %p33 = scmp.eq.s32.totalorder %s32, 0
      %s35 = sadd.s32 %s34, 1
      %s36 = scalar_select %p33, %s34, %s35
      %p39 = pneg %p33
      %p40 = scmp.eq.s32.totalorder %s12, 3
      %p41 = por %p39, %p40
      %p42 = scmp.ne.s32.totalorder %s34, %s37
      %p43 = scmp.eq.s32.totalorder %s12, 0
      %p44 = por %p42, %p43
      %p45 = scmp.ne.s32.totalorder %s34, %s37
      %p46 = scmp.eq.s32.totalorder %s17, 3
      %p47 = por %p45, %p46
      %p48 = scmp.ne.s32.totalorder %s37, %s38
      %p49 = scmp.eq.s32.totalorder %s17, 0
      %p50 = por %p48, %p49
      %p51 = scmp.ne.s32.totalorder %s37, %s38
      %p52 = scmp.eq.s32.totalorder %s18, 3
      %p53 = por %p51, %p52
      %p55 = scmp.ne.s32.totalorder %s38, %s54
      %p56 = scmp.eq.s32.totalorder %s18, 0
      %p57 = por %p55, %p56
      %s59 = sadd.s32 %s58, 1
      %p62 = scmp.eq.s32.totalorder %s12, 3
      %p63 = scmp.ne.s32.totalorder %s58, %s60
      %p64 = scmp.eq.s32.totalorder %s12, 0
      %p65 = por %p63, %p64
      %p66 = scmp.ne.s32.totalorder %s58, %s60
      %p67 = scmp.eq.s32.totalorder %s17, 3
      %p68 = por %p66, %p67
      %p69 = scmp.ne.s32.totalorder %s60, %s61
      %p70 = scmp.eq.s32.totalorder %s17, 0
      %p71 = por %p69, %p70
      %p72 = scmp.ne.s32.totalorder %s60, %s61
      %p73 = scmp.eq.s32.totalorder %s18, 3
      %p74 = por %p72, %p73
      %p76 = scmp.ne.s32.totalorder %s61, %s75
      %p77 = scmp.eq.s32.totalorder %s18, 0
      %p78 = por %p76, %p77
      %s80 = sadd.s32 %s79, 1
      %p83 = scmp.eq.s32.totalorder %s12, 3
      %p84 = scmp.ne.s32.totalorder %s79, %s81
      %p85 = scmp.eq.s32.totalorder %s12, 0
      %p86 = por %p84, %p85
      %p87 = scmp.ne.s32.totalorder %s79, %s81
      %p88 = scmp.eq.s32.totalorder %s17, 3
      %p89 = por %p87, %p88
      %p90 = scmp.ne.s32.totalorder %s81, %s82
      %p91 = scmp.eq.s32.totalorder %s17, 0
      %p92 = por %p90, %p91
      %p93 = scmp.ne.s32.totalorder %s81, %s82
      %p94 = scmp.eq.s32.totalorder %s18, 3
      %p95 = por %p93, %p94
      %p97 = scmp.ne.s32.totalorder %s82, %s96
      %p98 = scmp.eq.s32.totalorder %s18, 0
      %p99 = por %p97, %p98
      %s100 = ssub.s32 %s19, %s31
      %s101 = ssub.s32 %s20, %s27
      %s102 = sor.u32 %s100, %s101
      %p103 = scmp.eq.s32.totalorder %s102, 0
      %s105 = sadd.s32 %s104, 1
      %s106 = scalar_select %p103, %s104, %s105
      %p109 = pneg %p103
      %p110 = scmp.eq.s32.totalorder %s12, 3
      %p111 = por %p109, %p110
      %p112 = scmp.ne.s32.totalorder %s104, %s107
      %p113 = scmp.eq.s32.totalorder %s12, 0
      %p114 = por %p112, %p113
      %p115 = scmp.ne.s32.totalorder %s104, %s107
      %p116 = scmp.eq.s32.totalorder %s17, 3
      %p117 = por %p115, %p116
      %p118 = scmp.ne.s32.totalorder %s107, %s108
      %p119 = scmp.eq.s32.totalorder %s17, 0
      %p120 = por %p118, %p119
      %p121 = scmp.ne.s32.totalorder %s107, %s108
      %p122 = scmp.eq.s32.totalorder %s18, 3
      %p123 = por %p121, %p122
      %p125 = scmp.ne.s32.totalorder %s108, %s124
      %p126 = scmp.eq.s32.totalorder %s18, 0
      %p127 = por %p125, %p126
      %p128 = scmp.le.s32.totalorder 1, %s12
      %p129 = scmp.lt.s32.totalorder %s12, 5
      %p130 = pnand %p128, %p129
      %p131 = pneg %p130
      // Predicated region
      $region9: #{tpu_custom_call.1} parent=5 // pred_check
        _
      $region10: #{tpu_custom_call.1} parent=5 // pred_check_branch
        %133 = sbr.rel (%p130) target = $region12
      $region11: #{tpu_custom_call.1} parent=5 // pred_region
        %s134 = ssub.s32 %s12, 1
        // Predicated region
        $region13: #{tpu_custom_call.1} parent=11 // pred_check
          %p135 = pneg %p71
        $region14: #{tpu_custom_call.1} parent=11 // pred_check_branch
          %137 = sbr.rel (%p135) target = $region16
        $region15: #{tpu_custom_call.1} parent=11 // pred_region
          _
        $region16: #{tpu_custom_call.1} parent=11 // pred_fallthru
          _
        // Predicated region
        $region17: #{tpu_custom_call.1} parent=11 // pred_check
          %p138 = pneg %p92
        $region18: #{tpu_custom_call.1} parent=11 // pred_check_branch
          %140 = sbr.rel (%p138) target = $region20
        $region19: #{tpu_custom_call.1} parent=11 // pred_region
          _
        $region20: #{tpu_custom_call.1} parent=11 // pred_fallthru
          _
      $region12: #{tpu_custom_call.1} parent=5 // pred_fallthru
        _
      %p141 = scmp.lt.s32.totalorder %s12, 4
      // Predicated region
      $region21: #{tpu_custom_call.1} parent=5 // pred_check
        %p142 = pneg %p141
      $region22: #{tpu_custom_call.1} parent=5 // pred_check_branch
        %144 = sbr.rel (%p142) target = $region24
      $region23: #{tpu_custom_call.1} parent=5 // pred_region
        // Predicated region
        $region25: #{tpu_custom_call.1} parent=23 // pred_check
          %p145 = pneg %p44
        $region26: #{tpu_custom_call.1} parent=23 // pred_check_branch
          %147 = sbr.rel (%p145) target = $region28
        $region27: #{tpu_custom_call.1} parent=23 // pred_region
          %p148 = scmp.lt.s32.totalorder %s19, 1
          %s149 = scalar_select %p148, %s19, 1
          %s150 = smul.addr %s149, 54
          %s151 = smul.addr %s150, 8
          %s152 = scalar_lea.vmem %s0, %s151
        $region28: #{tpu_custom_call.1} parent=23 // pred_fallthru
          _
      $region24: #{tpu_custom_call.1} parent=5 // pred_fallthru
        _
      %p153 = scmp.le.s32.totalorder 1, %s12
      %p154 = scmp.lt.s32.totalorder %s12, 5
      %p155 = pnand %p153, %p154
      %p156 = pneg %p155
      // Predicated region
      $region29: #{tpu_custom_call.1} parent=5 // pred_check
        _
      $region30: #{tpu_custom_call.1} parent=5 // pred_check_branch
        %158 = sbr.rel (%p155) target = $region32
      $region31: #{tpu_custom_call.1} parent=5 // pred_region
        %s159 = ssub.s32 %s12, 1
        %p160 = scmp.lt.s32.totalorder %s21, 1
        %s161 = scalar_select %p160, %s21, 1
        %s162 = smul.addr %s161, 54
        %s163 = smul.addr %s162, 8
        %s164 = scalar_lea.vmem %s0, %s163
        %p165 = pneg %p50
        %p166 = pneg %p47
        %p167 = pneg %p71
        %p168 = pneg %p68
        %p169 = pneg %p92
        %p170 = pneg %p89
        %p171 = pneg %p120
        %p172 = pneg %p117
        %s173 = sand.u32 %s107, 1
        %s174 = scalar_lea.sflag [#allocation3], %s173
        %s175 = sand.u32 %s107, 1
        %s176 = smul.addr %s175, 128
        %s177 = scalar_lea.vmem [#allocation2], %s176
        %p178 = scmp.lt.s32.totalorder %s21, 1
        %s179 = scalar_select %p178, %s21, 1
        %s180 = smul.addr %s179, 54
        %s181 = smul.addr %s180, 8
        %s182 = scalar_lea.vmem %s0, %s181
        %s183 = smul.u32 8, %s22
        %s184 = smul.u32 %s22, 8
        %s185 = smul.u32 %s184, 24
        %s186 = scalar_lea.vmem %s182, %s185
        %v187 = vld [vmem:[%s186] sm:$0xff]
        %v188 = vld [vmem:[%s186 + $0x8] sm:$0xff]
        %v189 = vld [vmem:[%s186 + $0x18] sm:$0xff]
        %v190 = vld [vmem:[%s186 + $0x20] sm:$0xff]
        %v191 = vld [vmem:[%s186 + $0x30] sm:$0xff]
        %v192 = vld [vmem:[%s186 + $0x38] sm:$0xff]
        %v193 = vld [vmem:[%s186 + $0x48] sm:$0xff]
        %v194 = vld [vmem:[%s186 + $0x50] sm:$0xff]
        %v195 = vld [vmem:[%s186 + $0x60] sm:$0xff]
        %v196 = vld [vmem:[%s186 + $0x68] sm:$0xff]
        %v197 = vld [vmem:[%s186 + $0x78] sm:$0xff]
        %v198 = vld [vmem:[%s186 + $0x80] sm:$0xff]
        %v199 = vld [vmem:[%s186 + $0x90] sm:$0xff]
        %v200 = vld [vmem:[%s186 + $0x98] sm:$0xff]
        %v201 = vld [vmem:[%s186 + $0xa8] sm:$0xff]
        %v202 = vld [vmem:[%s186 + $0xb0] sm:$0xff]
        %v203 = vld [vmem:[%s1] sm:$0xf]
        %v204 = vld [vmem:[%s186 + $0x1] sm:$0xff]
        %v205 = vld [vmem:[%s186 + $0x9] sm:$0xff]
        %v206 = vld [vmem:[%s186 + $0x19] sm:$0xff]
        %v207 = vld [vmem:[%s186 + $0x21] sm:$0xff]
        %v208 = vld [vmem:[%s186 + $0x31] sm:$0xff]
        %v209 = vld [vmem:[%s186 + $0x39] sm:$0xff]
        %v210 = vld [vmem:[%s186 + $0x49] sm:$0xff]
        %v211 = vld [vmem:[%s186 + $0x51] sm:$0xff]
        %v212 = vld [vmem:[%s186 + $0x61] sm:$0xff]
        %v213 = vld [vmem:[%s186 + $0x69] sm:$0xff]
        %v214 = vld [vmem:[%s186 + $0x79] sm:$0xff]
        %v215 = vld [vmem:[%s186 + $0x81] sm:$0xff]
        %v216 = vld [vmem:[%s186 + $0x91] sm:$0xff]
        %v217 = vld [vmem:[%s186 + $0x99] sm:$0xff]
        %v218 = vld [vmem:[%s186 + $0xa9] sm:$0xff]
        %v219 = vld [vmem:[%s186 + $0xb1] sm:$0xff]
        %v220 = vld [vmem:[%s1 + $0x4] sm:$0xf]
        %vm221 = vcmask 31744
        %v223 = vsel %vm221, %v204, 0
        %v226 = vsel %vm221, %v205, 0
        %v229 = vsel %vm221, %v206, 0
        %v232 = vsel %vm221, %v207, 0
        %v235 = vsel %vm221, %v208, 0
        %v238 = vsel %vm221, %v209, 0
        %v241 = vsel %vm221, %v210, 0
        %v244 = vsel %vm221, %v211, 0
        %v247 = vsel %vm221, %v212, 0
        %v250 = vsel %vm221, %v213, 0
        %v253 = vsel %vm221, %v214, 0
        %v256 = vsel %vm221, %v215, 0
        %v259 = vsel %vm221, %v216, 0
        %v262 = vsel %vm221, %v217, 0
        %v265 = vsel %vm221, %v218, 0
        %v268 = vsel %vm221, %v219, 0
        %vm270 = vcmask 1043456
        %v272 = vsel %vm270, %v220, 0
        %274 = vmatpush.msra.mxu0 0.0
        %275 = vmatpush.msra.mxu0 0.0
        %276 = vmatpush.msra.mxu0 0.0
        %277 = vmatpush.msra.mxu0 0.0
        %278 = vmatpush.msra.mxu0 0.0
        %279 = vmatpush.msra.mxu0 0.0
        %280 = vmatpush.msra.mxu0 0.0
        %281 = vmatpush.msra.mxu0 0.0
        %282 = vmatpush.msra.mxu0 0.0
        %283 = vmatpush.msra.mxu0 0.0
        %284 = vmatpush.msra.mxu0 0.0
        %285 = vmatpush.msra.mxu0 0.0
        %286 = vmatpush.msra.mxu0 0.0
        %287 = vmatpush.msra.mxu0 0.0
        %288 = vmatpush.msra.mxu0 0.0
        %289 = vmatpush.msra.mxu0 %v272
        %290 = vmatmul.f32.gmra.mxu0 %v223
        %v291 = vpop.f32.mrf.mxu0
        %v292 = vadd.f32 0.0, %v291
        %293 = vmatmul.f32.gmra.mxu0 %v226
        %v294 = vpop.f32.mrf.mxu0
        %v295 = vadd.f32 0.0, %v294
        %296 = vmatmul.f32.gmra.mxu0 %v229
        %v297 = vpop.f32.mrf.mxu0
        %v298 = vadd.f32 0.0, %v297
        %299 = vmatmul.f32.gmra.mxu0 %v232
        %v300 = vpop.f32.mrf.mxu0
        %v301 = vadd.f32 0.0, %v300
        %302 = vmatmul.f32.gmra.mxu0 %v235
        %v303 = vpop.f32.mrf.mxu0
        %v304 = vadd.f32 0.0, %v303
        %305 = vmatmul.f32.gmra.mxu0 %v238
        %v306 = vpop.f32.mrf.mxu0
        %v307 = vadd.f32 0.0, %v306
        %308 = vmatmul.f32.gmra.mxu0 %v241
        %v309 = vpop.f32.mrf.mxu0
        %v310 = vadd.f32 0.0, %v309
        %311 = vmatmul.f32.gmra.mxu0 %v244
        %v312 = vpop.f32.mrf.mxu0
        %v313 = vadd.f32 0.0, %v312
        %314 = vmatmul.f32.gmra.mxu0 %v247
        %v315 = vpop.f32.mrf.mxu0
        %v316 = vadd.f32 0.0, %v315
        %317 = vmatmul.f32.gmra.mxu0 %v250
        %v318 = vpop.f32.mrf.mxu0
        %v319 = vadd.f32 0.0, %v318
        %320 = vmatmul.f32.gmra.mxu0 %v253
        %v321 = vpop.f32.mrf.mxu0
        %v322 = vadd.f32 0.0, %v321
        %323 = vmatmul.f32.gmra.mxu0 %v256
        %v324 = vpop.f32.mrf.mxu0
        %v325 = vadd.f32 0.0, %v324
        %326 = vmatmul.f32.gmra.mxu0 %v259
        %v327 = vpop.f32.mrf.mxu0
        %v328 = vadd.f32 0.0, %v327
        %329 = vmatmul.f32.gmra.mxu0 %v262
        %v330 = vpop.f32.mrf.mxu0
        %v331 = vadd.f32 0.0, %v330
        %332 = vmatmul.f32.gmra.mxu0 %v265
        %v333 = vpop.f32.mrf.mxu0
        %v334 = vadd.f32 0.0, %v333
        %335 = vmatmul.f32.gmra.mxu0 %v268
        %v336 = vpop.f32.mrf.mxu0
        %v337 = vadd.f32 0.0, %v336
        %338 = vdwg.mxu0
        %v340 = vsel %vm221, %v187, 0
        %v343 = vsel %vm221, %v188, 0
        %v346 = vsel %vm221, %v189, 0
        %v349 = vsel %vm221, %v190, 0
        %v352 = vsel %vm221, %v191, 0
        %v355 = vsel %vm221, %v192, 0
        %v358 = vsel %vm221, %v193, 0
        %v361 = vsel %vm221, %v194, 0
        %v364 = vsel %vm221, %v195, 0
        %v367 = vsel %vm221, %v196, 0
        %v370 = vsel %vm221, %v197, 0
        %v373 = vsel %vm221, %v198, 0
        %v376 = vsel %vm221, %v199, 0
        %v379 = vsel %vm221, %v200, 0
        %v382 = vsel %vm221, %v201, 0
        %v385 = vsel %vm221, %v202, 0
        %v388 = vsel %vm270, %v203, 0
        %390 = vmatpush.msra.mxu0 0.0
        %391 = vmatpush.msra.mxu0 0.0
        %392 = vmatpush.msra.mxu0 0.0
        %393 = vmatpush.msra.mxu0 0.0
        %394 = vmatpush.msra.mxu0 0.0
        %395 = vmatpush.msra.mxu0 0.0
        %396 = vmatpush.msra.mxu0 0.0
        %397 = vmatpush.msra.mxu0 0.0
        %398 = vmatpush.msra.mxu0 0.0
        %399 = vmatpush.msra.mxu0 0.0
        %400 = vmatpush.msra.mxu0 0.0
        %401 = vmatpush.msra.mxu0 0.0
        %402 = vmatpush.msra.mxu0 0.0
        %403 = vmatpush.msra.mxu0 0.0
        %404 = vmatpush.msra.mxu0 0.0
        %405 = vmatpush.msra.mxu0 %v388
        %406 = vmatmul.f32.gmra.mxu0 %v340
        %v407 = vpop.f32.mrf.mxu0
        %v408 = vadd.f32 %v292, %v407
        %409 = vmatmul.f32.gmra.mxu0 %v343
        %v410 = vpop.f32.mrf.mxu0
        %v411 = vadd.f32 %v295, %v410
        %412 = vmatmul.f32.gmra.mxu0 %v346
        %v413 = vpop.f32.mrf.mxu0
        %v414 = vadd.f32 %v298, %v413
        %415 = vmatmul.f32.gmra.mxu0 %v349
        %v416 = vpop.f32.mrf.mxu0
        %v417 = vadd.f32 %v301, %v416
        %418 = vmatmul.f32.gmra.mxu0 %v352
        %v419 = vpop.f32.mrf.mxu0
        %v420 = vadd.f32 %v304, %v419
        %421 = vmatmul.f32.gmra.mxu0 %v355
        %v422 = vpop.f32.mrf.mxu0
        %v423 = vadd.f32 %v307, %v422
        %424 = vmatmul.f32.gmra.mxu0 %v358
        %v425 = vpop.f32.mrf.mxu0
        %v426 = vadd.f32 %v310, %v425
        %427 = vmatmul.f32.gmra.mxu0 %v361
        %v428 = vpop.f32.mrf.mxu0
        %v429 = vadd.f32 %v313, %v428
        %430 = vmatmul.f32.gmra.mxu0 %v364
        %v431 = vpop.f32.mrf.mxu0
        %v432 = vadd.f32 %v316, %v431
        %433 = vmatmul.f32.gmra.mxu0 %v367
        %v434 = vpop.f32.mrf.mxu0
        %v435 = vadd.f32 %v319, %v434
        %436 = vmatmul.f32.gmra.mxu0 %v370
        %v437 = vpop.f32.mrf.mxu0
        %v438 = vadd.f32 %v322, %v437
        %439 = vmatmul.f32.gmra.mxu0 %v373
        %v440 = vpop.f32.mrf.mxu0
        %v441 = vadd.f32 %v325, %v440
        %442 = vmatmul.f32.gmra.mxu0 %v376
        %v443 = vpop.f32.mrf.mxu0
        %v444 = vadd.f32 %v328, %v443
        %445 = vmatmul.f32.gmra.mxu0 %v379
        %v446 = vpop.f32.mrf.mxu0
        %v447 = vadd.f32 %v331, %v446
        %448 = vmatmul.f32.gmra.mxu0 %v382
        %v449 = vpop.f32.mrf.mxu0
        %v450 = vadd.f32 %v334, %v449
        %451 = vmatmul.f32.gmra.mxu0 %v385
        %v452 = vpop.f32.mrf.mxu0
        %v453 = vadd.f32 %v337, %v452
        %454 = vdwg.mxu0
        %v455 = vld [vmem:[%s186 + $0x2] sm:$0xff]
        %v456 = vld [vmem:[%s186 + $0xa] sm:$0xff]
        %v457 = vld [vmem:[%s186 + $0x1a] sm:$0xff]
        %v458 = vld [vmem:[%s186 + $0x22] sm:$0xff]
        %v459 = vld [vmem:[%s186 + $0x32] sm:$0xff]
        %v460 = vld [vmem:[%s186 + $0x3a] sm:$0xff]
        %v461 = vld [vmem:[%s186 + $0x4a] sm:$0xff]
        %v462 = vld [vmem:[%s186 + $0x52] sm:$0xff]
        %v463 = vld [vmem:[%s186 + $0x62] sm:$0xff]
        %v464 = vld [vmem:[%s186 + $0x6a] sm:$0xff]
        %v465 = vld [vmem:[%s186 + $0x7a] sm:$0xff]
        %v466 = vld [vmem:[%s186 + $0x82] sm:$0xff]
        %v467 = vld [vmem:[%s186 + $0x92] sm:$0xff]
        %v468 = vld [vmem:[%s186 + $0x9a] sm:$0xff]
        %v469 = vld [vmem:[%s186 + $0xaa] sm:$0xff]
        %v470 = vld [vmem:[%s186 + $0xb2] sm:$0xff]
        %v471 = vld [vmem:[%s1 + $0x8] sm:$0xf]
        %v473 = vsel %vm221, %v455, 0
        %v476 = vsel %vm221, %v456, 0
        %v479 = vsel %vm221, %v457, 0
        %v482 = vsel %vm221, %v458, 0
        %v485 = vsel %vm221, %v459, 0
        %v488 = vsel %vm221, %v460, 0
        %v491 = vsel %vm221, %v461, 0
        %v494 = vsel %vm221, %v462, 0
        %v497 = vsel %vm221, %v463, 0
        %v500 = vsel %vm221, %v464, 0
        %v503 = vsel %vm221, %v465, 0
        %v506 = vsel %vm221, %v466, 0
        %v509 = vsel %vm221, %v467, 0
        %v512 = vsel %vm221, %v468, 0
        %v515 = vsel %vm221, %v469, 0
        %v518 = vsel %vm221, %v470, 0
        %v521 = vsel %vm270, %v471, 0
        %523 = vmatpush.msra.mxu0 0.0
        %524 = vmatpush.msra.mxu0 0.0
        %525 = vmatpush.msra.mxu0 0.0
        %526 = vmatpush.msra.mxu0 0.0
        %527 = vmatpush.msra.mxu0 0.0
        %528 = vmatpush.msra.mxu0 0.0
        %529 = vmatpush.msra.mxu0 0.0
        %530 = vmatpush.msra.mxu0 0.0
        %531 = vmatpush.msra.mxu0 0.0
        %532 = vmatpush.msra.mxu0 0.0
        %533 = vmatpush.msra.mxu0 0.0
        %534 = vmatpush.msra.mxu0 0.0
        %535 = vmatpush.msra.mxu0 0.0
        %536 = vmatpush.msra.mxu0 0.0
        %537 = vmatpush.msra.mxu0 0.0
        %538 = vmatpush.msra.mxu0 %v521
        %539 = vmatmul.f32.gmra.mxu0 %v473
        %v540 = vpop.f32.mrf.mxu0
        %v541 = vadd.f32 0.0, %v540
        %542 = vmatmul.f32.gmra.mxu0 %v476
        %v543 = vpop.f32.mrf.mxu0
        %v544 = vadd.f32 0.0, %v543
        %545 = vmatmul.f32.gmra.mxu0 %v479
        %v546 = vpop.f32.mrf.mxu0
        %v547 = vadd.f32 0.0, %v546
        %548 = vmatmul.f32.gmra.mxu0 %v482
        %v549 = vpop.f32.mrf.mxu0
        %v550 = vadd.f32 0.0, %v549
        %551 = vmatmul.f32.gmra.mxu0 %v485
        %v552 = vpop.f32.mrf.mxu0
        %v553 = vadd.f32 0.0, %v552
        %554 = vmatmul.f32.gmra.mxu0 %v488
        %v555 = vpop.f32.mrf.mxu0
        %v556 = vadd.f32 0.0, %v555
        %557 = vmatmul.f32.gmra.mxu0 %v491
        %v558 = vpop.f32.mrf.mxu0
        %v559 = vadd.f32 0.0, %v558
        %560 = vmatmul.f32.gmra.mxu0 %v494
        %v561 = vpop.f32.mrf.mxu0
        %v562 = vadd.f32 0.0, %v561
        %563 = vmatmul.f32.gmra.mxu0 %v497
        %v564 = vpop.f32.mrf.mxu0
        %v565 = vadd.f32 0.0, %v564
        %566 = vmatmul.f32.gmra.mxu0 %v500
        %v567 = vpop.f32.mrf.mxu0
        %v568 = vadd.f32 0.0, %v567
        %569 = vmatmul.f32.gmra.mxu0 %v503
        %v570 = vpop.f32.mrf.mxu0
        %v571 = vadd.f32 0.0, %v570
        %572 = vmatmul.f32.gmra.mxu0 %v506
        %v573 = vpop.f32.mrf.mxu0
        %v574 = vadd.f32 0.0, %v573
        %575 = vmatmul.f32.gmra.mxu0 %v509
        %v576 = vpop.f32.mrf.mxu0
        %v577 = vadd.f32 0.0, %v576
        %578 = vmatmul.f32.gmra.mxu0 %v512
        %v579 = vpop.f32.mrf.mxu0
        %v580 = vadd.f32 0.0, %v579
        %581 = vmatmul.f32.gmra.mxu0 %v515
        %v582 = vpop.f32.mrf.mxu0
        %v583 = vadd.f32 0.0, %v582
        %584 = vmatmul.f32.gmra.mxu0 %v518
        %v585 = vpop.f32.mrf.mxu0
        %v586 = vadd.f32 0.0, %v585
        %587 = vdwg.mxu0
        %v588 = vadd.f32 %v408, %v541
        %v589 = vadd.f32 %v411, %v544
        %v590 = vadd.f32 %v414, %v547
        %v591 = vadd.f32 %v417, %v550
        %v592 = vadd.f32 %v420, %v553
        %v593 = vadd.f32 %v423, %v556
        %v594 = vadd.f32 %v426, %v559
        %v595 = vadd.f32 %v429, %v562
        %v596 = vadd.f32 %v432, %v565
        %v597 = vadd.f32 %v435, %v568
        %v598 = vadd.f32 %v438, %v571
        %v599 = vadd.f32 %v441, %v574
        %v600 = vadd.f32 %v444, %v577
        %v601 = vadd.f32 %v447, %v580
        %v602 = vadd.f32 %v450, %v583
        %v603 = vadd.f32 %v453, %v586
        %s604 = sadd.s32 %s184, 1
        %s605 = smul.u32 %s604, 24
        %s606 = scalar_lea.vmem %s182, %s605
        %v607 = vld [vmem:[%s606] sm:$0xff]
        %v608 = vld [vmem:[%s606 + $0x8] sm:$0xff]
        %v609 = vld [vmem:[%s606 + $0x18] sm:$0xff]
        %v610 = vld [vmem:[%s606 + $0x20] sm:$0xff]
        %v611 = vld [vmem:[%s606 + $0x30] sm:$0xff]
        %v612 = vld [vmem:[%s606 + $0x38] sm:$0xff]
        %v613 = vld [vmem:[%s606 + $0x48] sm:$0xff]
        %v614 = vld [vmem:[%s606 + $0x50] sm:$0xff]
        %v615 = vld [vmem:[%s606 + $0x60] sm:$0xff]
        %v616 = vld [vmem:[%s606 + $0x68] sm:$0xff]
        %v617 = vld [vmem:[%s606 + $0x78] sm:$0xff]
        %v618 = vld [vmem:[%s606 + $0x80] sm:$0xff]
        %v619 = vld [vmem:[%s606 + $0x90] sm:$0xff]
        %v620 = vld [vmem:[%s606 + $0x98] sm:$0xff]
        %v621 = vld [vmem:[%s606 + $0xa8] sm:$0xff]
        %v622 = vld [vmem:[%s606 + $0xb0] sm:$0xff]
        %v623 = vld [vmem:[%s1 + $0xc] sm:$0xf]
        %v625 = vsel %vm221, %v607, 0
        %v628 = vsel %vm221, %v608, 0
        %v631 = vsel %vm221, %v609, 0
        %v634 = vsel %vm221, %v610, 0
        %v637 = vsel %vm221, %v611, 0
        %v640 = vsel %vm221, %v612, 0
        %v643 = vsel %vm221, %v613, 0
        %v646 = vsel %vm221, %v614, 0
        %v649 = vsel %vm221, %v615, 0
        %v652 = vsel %vm221, %v616, 0
        %v655 = vsel %vm221, %v617, 0
        %v658 = vsel %vm221, %v618, 0
        %v661 = vsel %vm221, %v619, 0
        %v664 = vsel %vm221, %v620, 0
        %v667 = vsel %vm221, %v621, 0
        %v670 = vsel %vm221, %v622, 0
        %v673 = vsel %vm270, %v623, 0
        %675 = vmatpush.msra.mxu0 0.0
        %676 = vmatpush.msra.mxu0 0.0
        %677 = vmatpush.msra.mxu0 0.0
        %678 = vmatpush.msra.mxu0 0.0
        %679 = vmatpush.msra.mxu0 0.0
        %680 = vmatpush.msra.mxu0 0.0
        %681 = vmatpush.msra.mxu0 0.0
        %682 = vmatpush.msra.mxu0 0.0
        %683 = vmatpush.msra.mxu0 0.0
        %684 = vmatpush.msra.mxu0 0.0
        %685 = vmatpush.msra.mxu0 0.0
        %686 = vmatpush.msra.mxu0 0.0
        %687 = vmatpush.msra.mxu0 0.0
        %688 = vmatpush.msra.mxu0 0.0
        %689 = vmatpush.msra.mxu0 0.0
        %690 = vmatpush.msra.mxu0 %v673
        %691 = vmatmul.f32.gmra.mxu0 %v625
        %v692 = vpop.f32.mrf.mxu0
        %v693 = vadd.f32 0.0, %v692
        %694 = vmatmul.f32.gmra.mxu0 %v628
        %v695 = vpop.f32.mrf.mxu0
        %v696 = vadd.f32 0.0, %v695
        %697 = vmatmul.f32.gmra.mxu0 %v631
        %v698 = vpop.f32.mrf.mxu0
        %v699 = vadd.f32 0.0, %v698
        %700 = vmatmul.f32.gmra.mxu0 %v634
        %v701 = vpop.f32.mrf.mxu0
        %v702 = vadd.f32 0.0, %v701
        %703 = vmatmul.f32.gmra.mxu0 %v637
        %v704 = vpop.f32.mrf.mxu0
        %v705 = vadd.f32 0.0, %v704
        %706 = vmatmul.f32.gmra.mxu0 %v640
        %v707 = vpop.f32.mrf.mxu0
        %v708 = vadd.f32 0.0, %v707
        %709 = vmatmul.f32.gmra.mxu0 %v643
        %v710 = vpop.f32.mrf.mxu0
        %v711 = vadd.f32 0.0, %v710
        %712 = vmatmul.f32.gmra.mxu0 %v646
        %v713 = vpop.f32.mrf.mxu0
        %v714 = vadd.f32 0.0, %v713
        %715 = vmatmul.f32.gmra.mxu0 %v649
        %v716 = vpop.f32.mrf.mxu0
        %v717 = vadd.f32 0.0, %v716
        %718 = vmatmul.f32.gmra.mxu0 %v652
        %v719 = vpop.f32.mrf.mxu0
        %v720 = vadd.f32 0.0, %v719
        %721 = vmatmul.f32.gmra.mxu0 %v655
        %v722 = vpop.f32.mrf.mxu0
        %v723 = vadd.f32 0.0, %v722
        %724 = vmatmul.f32.gmra.mxu0 %v658
        %v725 = vpop.f32.mrf.mxu0
        %v726 = vadd.f32 0.0, %v725
        %727 = vmatmul.f32.gmra.mxu0 %v661
        %v728 = vpop.f32.mrf.mxu0
        %v729 = vadd.f32 0.0, %v728
        %730 = vmatmul.f32.gmra.mxu0 %v664
        %v731 = vpop.f32.mrf.mxu0
        %v732 = vadd.f32 0.0, %v731
        %733 = vmatmul.f32.gmra.mxu0 %v667
        %v734 = vpop.f32.mrf.mxu0
        %v735 = vadd.f32 0.0, %v734
        %736 = vmatmul.f32.gmra.mxu0 %v670
        %v737 = vpop.f32.mrf.mxu0
        %v738 = vadd.f32 0.0, %v737
        %739 = vdwg.mxu0
        %v740 = vadd.f32 %v588, %v693
        %v741 = vadd.f32 %v589, %v696
        %v742 = vadd.f32 %v590, %v699
        %v743 = vadd.f32 %v591, %v702
        %v744 = vadd.f32 %v592, %v705
        %v745 = vadd.f32 %v593, %v708
        %v746 = vadd.f32 %v594, %v711
        %v747 = vadd.f32 %v595, %v714
        %v748 = vadd.f32 %v596, %v717
        %v749 = vadd.f32 %v597, %v720
        %v750 = vadd.f32 %v598, %v723
        %v751 = vadd.f32 %v599, %v726
        %v752 = vadd.f32 %v600, %v729
        %v753 = vadd.f32 %v601, %v732
        %v754 = vadd.f32 %v602, %v735
        %v755 = vadd.f32 %v603, %v738
        %v756 = vld [vmem:[%s606 + $0x1] sm:$0xff]
        %v757 = vld [vmem:[%s606 + $0x9] sm:$0xff]
        %v758 = vld [vmem:[%s606 + $0x19] sm:$0xff]
        %v759 = vld [vmem:[%s606 + $0x21] sm:$0xff]
        %v760 = vld [vmem:[%s606 + $0x31] sm:$0xff]
        %v761 = vld [vmem:[%s606 + $0x39] sm:$0xff]
        %v762 = vld [vmem:[%s606 + $0x49] sm:$0xff]
        %v763 = vld [vmem:[%s606 + $0x51] sm:$0xff]
        %v764 = vld [vmem:[%s606 + $0x61] sm:$0xff]
        %v765 = vld [vmem:[%s606 + $0x69] sm:$0xff]
        %v766 = vld [vmem:[%s606 + $0x79] sm:$0xff]
        %v767 = vld [vmem:[%s606 + $0x81] sm:$0xff]
        %v768 = vld [vmem:[%s606 + $0x91] sm:$0xff]
        %v769 = vld [vmem:[%s606 + $0x99] sm:$0xff]
        %v770 = vld [vmem:[%s606 + $0xa9] sm:$0xff]
        %v771 = vld [vmem:[%s606 + $0xb1] sm:$0xff]
        %v772 = vld [vmem:[%s1 + $0x10] sm:$0xf]
        %v774 = vsel %vm221, %v756, 0
        %v777 = vsel %vm221, %v757, 0
        %v780 = vsel %vm221, %v758, 0
        %v783 = vsel %vm221, %v759, 0
        %v786 = vsel %vm221, %v760, 0
        %v789 = vsel %vm221, %v761, 0
        %v792 = vsel %vm221, %v762, 0
        %v795 = vsel %vm221, %v763, 0
        %v798 = vsel %vm221, %v764, 0
        %v801 = vsel %vm221, %v765, 0
        %v804 = vsel %vm221, %v766, 0
        %v807 = vsel %vm221, %v767, 0
        %v810 = vsel %vm221, %v768, 0
        %v813 = vsel %vm221, %v769, 0
        %v816 = vsel %vm221, %v770, 0
        %v819 = vsel %vm221, %v771, 0
        %v822 = vsel %vm270, %v772, 0
        %824 = vmatpush.msra.mxu0 0.0
        %825 = vmatpush.msra.mxu0 0.0
        %826 = vmatpush.msra.mxu0 0.0
        %827 = vmatpush.msra.mxu0 0.0
        %828 = vmatpush.msra.mxu0 0.0
        %829 = vmatpush.msra.mxu0 0.0
        %830 = vmatpush.msra.mxu0 0.0
        %831 = vmatpush.msra.mxu0 0.0
        %832 = vmatpush.msra.mxu0 0.0
        %833 = vmatpush.msra.mxu0 0.0
        %834 = vmatpush.msra.mxu0 0.0
        %835 = vmatpush.msra.mxu0 0.0
        %836 = vmatpush.msra.mxu0 0.0
        %837 = vmatpush.msra.mxu0 0.0
        %838 = vmatpush.msra.mxu0 0.0
        %839 = vmatpush.msra.mxu0 %v822
        %840 = vmatmul.f32.gmra.mxu0 %v774
        %v841 = vpop.f32.mrf.mxu0
        %v842 = vadd.f32 0.0, %v841
        %843 = vmatmul.f32.gmra.mxu0 %v777
        %v844 = vpop.f32.mrf.mxu0
        %v845 = vadd.f32 0.0, %v844
        %846 = vmatmul.f32.gmra.mxu0 %v780
        %v847 = vpop.f32.mrf.mxu0
        %v848 = vadd.f32 0.0, %v847
        %849 = vmatmul.f32.gmra.mxu0 %v783
        %v850 = vpop.f32.mrf.mxu0
        %v851 = vadd.f32 0.0, %v850
        %852 = vmatmul.f32.gmra.mxu0 %v786
        %v853 = vpop.f32.mrf.mxu0
        %v854 = vadd.f32 0.0, %v853
        %855 = vmatmul.f32.gmra.mxu0 %v789
        %v856 = vpop.f32.mrf.mxu0
        %v857 = vadd.f32 0.0, %v856
        %858 = vmatmul.f32.gmra.mxu0 %v792
        %v859 = vpop.f32.mrf.mxu0
        %v860 = vadd.f32 0.0, %v859
        %861 = vmatmul.f32.gmra.mxu0 %v795
        %v862 = vpop.f32.mrf.mxu0
        %v863 = vadd.f32 0.0, %v862
        %864 = vmatmul.f32.gmra.mxu0 %v798
        %v865 = vpop.f32.mrf.mxu0
        %v866 = vadd.f32 0.0, %v865
        %867 = vmatmul.f32.gmra.mxu0 %v801
        %v868 = vpop.f32.mrf.mxu0
        %v869 = vadd.f32 0.0, %v868
        %870 = vmatmul.f32.gmra.mxu0 %v804
        %v871 = vpop.f32.mrf.mxu0
        %v872 = vadd.f32 0.0, %v871
        %873 = vmatmul.f32.gmra.mxu0 %v807
        %v874 = vpop.f32.mrf.mxu0
        %v875 = vadd.f32 0.0, %v874
        %876 = vmatmul.f32.gmra.mxu0 %v810
        %v877 = vpop.f32.mrf.mxu0
        %v878 = vadd.f32 0.0, %v877
        %879 = vmatmul.f32.gmra.mxu0 %v813
        %v880 = vpop.f32.mrf.mxu0
        %v881 = vadd.f32 0.0, %v880
        %882 = vmatmul.f32.gmra.mxu0 %v816
        %v883 = vpop.f32.mrf.mxu0
        %v884 = vadd.f32 0.0, %v883
        %885 = vmatmul.f32.gmra.mxu0 %v819
        %v886 = vpop.f32.mrf.mxu0
        %v887 = vadd.f32 0.0, %v886
        %888 = vdwg.mxu0
        %v889 = vadd.f32 %v740, %v842
        %v890 = vadd.f32 %v741, %v845
        %v891 = vadd.f32 %v742, %v848
        %v892 = vadd.f32 %v743, %v851
        %v893 = vadd.f32 %v744, %v854
        %v894 = vadd.f32 %v745, %v857
        %v895 = vadd.f32 %v746, %v860
        %v896 = vadd.f32 %v747, %v863
        %v897 = vadd.f32 %v748, %v866
        %v898 = vadd.f32 %v749, %v869
        %v899 = vadd.f32 %v750, %v872
        %v900 = vadd.f32 %v751, %v875
        %v901 = vadd.f32 %v752, %v878
        %v902 = vadd.f32 %v753, %v881
        %v903 = vadd.f32 %v754, %v884
        %v904 = vadd.f32 %v755, %v887
        %v905 = vld [vmem:[%s606 + $0x2] sm:$0xff]
        %v906 = vld [vmem:[%s606 + $0xa] sm:$0xff]
        %v907 = vld [vmem:[%s606 + $0x1a] sm:$0xff]
        %v908 = vld [vmem:[%s606 + $0x22] sm:$0xff]
        %v909 = vld [vmem:[%s606 + $0x32] sm:$0xff]
        %v910 = vld [vmem:[%s606 + $0x3a] sm:$0xff]
        %v911 = vld [vmem:[%s606 + $0x4a] sm:$0xff]
        %v912 = vld [vmem:[%s606 + $0x52] sm:$0xff]
        %v913 = vld [vmem:[%s606 + $0x62] sm:$0xff]
        %v914 = vld [vmem:[%s606 + $0x6a] sm:$0xff]
        %v915 = vld [vmem:[%s606 + $0x7a] sm:$0xff]
        %v916 = vld [vmem:[%s606 + $0x82] sm:$0xff]
        %v917 = vld [vmem:[%s606 + $0x92] sm:$0xff]
        %v918 = vld [vmem:[%s606 + $0x9a] sm:$0xff]
        %v919 = vld [vmem:[%s606 + $0xaa] sm:$0xff]
        %v920 = vld [vmem:[%s606 + $0xb2] sm:$0xff]
        %v921 = vld [vmem:[%s1 + $0x14] sm:$0xf]
        %v923 = vsel %vm221, %v905, 0
        %v926 = vsel %vm221, %v906, 0
        %v929 = vsel %vm221, %v907, 0
        %v932 = vsel %vm221, %v908, 0
        %v935 = vsel %vm221, %v909, 0
        %v938 = vsel %vm221, %v910, 0
        %v941 = vsel %vm221, %v911, 0
        %v944 = vsel %vm221, %v912, 0
        %v947 = vsel %vm221, %v913, 0
        %v950 = vsel %vm221, %v914, 0
        %v953 = vsel %vm221, %v915, 0
        %v956 = vsel %vm221, %v916, 0
        %v959 = vsel %vm221, %v917, 0
        %v962 = vsel %vm221, %v918, 0
        %v965 = vsel %vm221, %v919, 0
        %v968 = vsel %vm221, %v920, 0
        %v971 = vsel %vm270, %v921, 0
        %973 = vmatpush.msra.mxu0 0.0
        %974 = vmatpush.msra.mxu0 0.0
        %975 = vmatpush.msra.mxu0 0.0
        %976 = vmatpush.msra.mxu0 0.0
        %977 = vmatpush.msra.mxu0 0.0
        %978 = vmatpush.msra.mxu0 0.0
        %979 = vmatpush.msra.mxu0 0.0
        %980 = vmatpush.msra.mxu0 0.0
        %981 = vmatpush.msra.mxu0 0.0
        %982 = vmatpush.msra.mxu0 0.0
        %983 = vmatpush.msra.mxu0 0.0
        %984 = vmatpush.msra.mxu0 0.0
        %985 = vmatpush.msra.mxu0 0.0
        %986 = vmatpush.msra.mxu0 0.0
        %987 = vmatpush.msra.mxu0 0.0
        %988 = vmatpush.msra.mxu0 %v971
        %989 = vmatmul.f32.gmra.mxu0 %v923
        %v990 = vpop.f32.mrf.mxu0
        %v991 = vadd.f32 0.0, %v990
        %992 = vmatmul.f32.gmra.mxu0 %v926
        %v993 = vpop.f32.mrf.mxu0
        %v994 = vadd.f32 0.0, %v993
        %995 = vmatmul.f32.gmra.mxu0 %v929
        %v996 = vpop.f32.mrf.mxu0
        %v997 = vadd.f32 0.0, %v996
        %998 = vmatmul.f32.gmra.mxu0 %v932
        %v999 = vpop.f32.mrf.mxu0
        %v1000 = vadd.f32 0.0, %v999
        %1001 = vmatmul.f32.gmra.mxu0 %v935
        %v1002 = vpop.f32.mrf.mxu0
        %v1003 = vadd.f32 0.0, %v1002
        %1004 = vmatmul.f32.gmra.mxu0 %v938
        %v1005 = vpop.f32.mrf.mxu0
        %v1006 = vadd.f32 0.0, %v1005
        %1007 = vmatmul.f32.gmra.mxu0 %v941
        %v1008 = vpop.f32.mrf.mxu0
        %v1009 = vadd.f32 0.0, %v1008
        %1010 = vmatmul.f32.gmra.mxu0 %v944
        %v1011 = vpop.f32.mrf.mxu0
        %v1012 = vadd.f32 0.0, %v1011
        %1013 = vmatmul.f32.gmra.mxu0 %v947
        %v1014 = vpop.f32.mrf.mxu0
        %v1015 = vadd.f32 0.0, %v1014
        %1016 = vmatmul.f32.gmra.mxu0 %v950
        %v1017 = vpop.f32.mrf.mxu0
        %v1018 = vadd.f32 0.0, %v1017
        %1019 = vmatmul.f32.gmra.mxu0 %v953
        %v1020 = vpop.f32.mrf.mxu0
        %v1021 = vadd.f32 0.0, %v1020
        %1022 = vmatmul.f32.gmra.mxu0 %v956
        %v1023 = vpop.f32.mrf.mxu0
        %v1024 = vadd.f32 0.0, %v1023
        %1025 = vmatmul.f32.gmra.mxu0 %v959
        %v1026 = vpop.f32.mrf.mxu0
        %v1027 = vadd.f32 0.0, %v1026
        %1028 = vmatmul.f32.gmra.mxu0 %v962
        %v1029 = vpop.f32.mrf.mxu0
        %v1030 = vadd.f32 0.0, %v1029
        %1031 = vmatmul.f32.gmra.mxu0 %v965
        %v1032 = vpop.f32.mrf.mxu0
        %v1033 = vadd.f32 0.0, %v1032
        %1034 = vmatmul.f32.gmra.mxu0 %v968
        %v1035 = vpop.f32.mrf.mxu0
        %v1036 = vadd.f32 0.0, %v1035
        %1037 = vdwg.mxu0
        %v1038 = vadd.f32 %v889, %v991
        %v1039 = vadd.f32 %v890, %v994
        %v1040 = vadd.f32 %v891, %v997
        %v1041 = vadd.f32 %v892, %v1000
        %v1042 = vadd.f32 %v893, %v1003
        %v1043 = vadd.f32 %v894, %v1006
        %v1044 = vadd.f32 %v895, %v1009
        %v1045 = vadd.f32 %v896, %v1012
        %v1046 = vadd.f32 %v897, %v1015
        %v1047 = vadd.f32 %v898, %v1018
        %v1048 = vadd.f32 %v899, %v1021
        %v1049 = vadd.f32 %v900, %v1024
        %v1050 = vadd.f32 %v901, %v1027
        %v1051 = vadd.f32 %v902, %v1030
        %v1052 = vadd.f32 %v903, %v1033
        %v1053 = vadd.f32 %v904, %v1036
        %s1054 = sadd.s32 %s184, 2
        %s1055 = smul.u32 %s1054, 24
        %s1056 = scalar_lea.vmem %s182, %s1055
        %v1057 = vld [vmem:[%s1056] sm:$0xff]
        %v1058 = vld [vmem:[%s1056 + $0x8] sm:$0xff]
        %v1059 = vld [vmem:[%s1056 + $0x18] sm:$0xff]
        %v1060 = vld [vmem:[%s1056 + $0x20] sm:$0xff]
        %v1061 = vld [vmem:[%s1056 + $0x30] sm:$0xff]
        %v1062 = vld [vmem:[%s1056 + $0x38] sm:$0xff]
        %v1063 = vld [vmem:[%s1056 + $0x48] sm:$0xff]
        %v1064 = vld [vmem:[%s1056 + $0x50] sm:$0xff]
        %v1065 = vld [vmem:[%s1056 + $0x60] sm:$0xff]
        %v1066 = vld [vmem:[%s1056 + $0x68] sm:$0xff]
        %v1067 = vld [vmem:[%s1056 + $0x78] sm:$0xff]
        %v1068 = vld [vmem:[%s1056 + $0x80] sm:$0xff]
        %v1069 = vld [vmem:[%s1056 + $0x90] sm:$0xff]
        %v1070 = vld [vmem:[%s1056 + $0x98] sm:$0xff]
        %v1071 = vld [vmem:[%s1056 + $0xa8] sm:$0xff]
        %v1072 = vld [vmem:[%s1056 + $0xb0] sm:$0xff]
        %v1073 = vld [vmem:[%s1 + $0x18] sm:$0xf]
        %v1075 = vsel %vm221, %v1057, 0
        %v1078 = vsel %vm221, %v1058, 0
        %v1081 = vsel %vm221, %v1059, 0
        %v1084 = vsel %vm221, %v1060, 0
        %v1087 = vsel %vm221, %v1061, 0
        %v1090 = vsel %vm221, %v1062, 0
        %v1093 = vsel %vm221, %v1063, 0
        %v1096 = vsel %vm221, %v1064, 0
        %v1099 = vsel %vm221, %v1065, 0
        %v1102 = vsel %vm221, %v1066, 0
        %v1105 = vsel %vm221, %v1067, 0
        %v1108 = vsel %vm221, %v1068, 0
        %v1111 = vsel %vm221, %v1069, 0
        %v1114 = vsel %vm221, %v1070, 0
        %v1117 = vsel %vm221, %v1071, 0
        %v1120 = vsel %vm221, %v1072, 0
        %v1123 = vsel %vm270, %v1073, 0
        %1125 = vmatpush.msra.mxu0 0.0
        %1126 = vmatpush.msra.mxu0 0.0
        %1127 = vmatpush.msra.mxu0 0.0
        %1128 = vmatpush.msra.mxu0 0.0
        %1129 = vmatpush.msra.mxu0 0.0
        %1130 = vmatpush.msra.mxu0 0.0
        %1131 = vmatpush.msra.mxu0 0.0
        %1132 = vmatpush.msra.mxu0 0.0
        %1133 = vmatpush.msra.mxu0 0.0
        %1134 = vmatpush.msra.mxu0 0.0
        %1135 = vmatpush.msra.mxu0 0.0
        %1136 = vmatpush.msra.mxu0 0.0
        %1137 = vmatpush.msra.mxu0 0.0
        %1138 = vmatpush.msra.mxu0 0.0
        %1139 = vmatpush.msra.mxu0 0.0
        %1140 = vmatpush.msra.mxu0 %v1123
        %1141 = vmatmul.f32.gmra.mxu0 %v1075
        %v1142 = vpop.f32.mrf.mxu0
        %v1143 = vadd.f32 0.0, %v1142
        %1144 = vmatmul.f32.gmra.mxu0 %v1078
        %v1145 = vpop.f32.mrf.mxu0
        %v1146 = vadd.f32 0.0, %v1145
        %1147 = vmatmul.f32.gmra.mxu0 %v1081
        %v1148 = vpop.f32.mrf.mxu0
        %v1149 = vadd.f32 0.0, %v1148
        %1150 = vmatmul.f32.gmra.mxu0 %v1084
        %v1151 = vpop.f32.mrf.mxu0
        %v1152 = vadd.f32 0.0, %v1151
        %1153 = vmatmul.f32.gmra.mxu0 %v1087
        %v1154 = vpop.f32.mrf.mxu0
        %v1155 = vadd.f32 0.0, %v1154
        %1156 = vmatmul.f32.gmra.mxu0 %v1090
        %v1157 = vpop.f32.mrf.mxu0
        %v1158 = vadd.f32 0.0, %v1157
        %1159 = vmatmul.f32.gmra.mxu0 %v1093
        %v1160 = vpop.f32.mrf.mxu0
        %v1161 = vadd.f32 0.0, %v1160
        %1162 = vmatmul.f32.gmra.mxu0 %v1096
        %v1163 = vpop.f32.mrf.mxu0
        %v1164 = vadd.f32 0.0, %v1163
        %1165 = vmatmul.f32.gmra.mxu0 %v1099
        %v1166 = vpop.f32.mrf.mxu0
        %v1167 = vadd.f32 0.0, %v1166
        %1168 = vmatmul.f32.gmra.mxu0 %v1102
        %v1169 = vpop.f32.mrf.mxu0
        %v1170 = vadd.f32 0.0, %v1169
        %1171 = vmatmul.f32.gmra.mxu0 %v1105
        %v1172 = vpop.f32.mrf.mxu0
        %v1173 = vadd.f32 0.0, %v1172
        %1174 = vmatmul.f32.gmra.mxu0 %v1108
        %v1175 = vpop.f32.mrf.mxu0
        %v1176 = vadd.f32 0.0, %v1175
        %1177 = vmatmul.f32.gmra.mxu0 %v1111
        %v1178 = vpop.f32.mrf.mxu0
        %v1179 = vadd.f32 0.0, %v1178
        %1180 = vmatmul.f32.gmra.mxu0 %v1114
        %v1181 = vpop.f32.mrf.mxu0
        %v1182 = vadd.f32 0.0, %v1181
        %1183 = vmatmul.f32.gmra.mxu0 %v1117
        %v1184 = vpop.f32.mrf.mxu0
        %v1185 = vadd.f32 0.0, %v1184
        %1186 = vmatmul.f32.gmra.mxu0 %v1120
        %v1187 = vpop.f32.mrf.mxu0
        %v1188 = vadd.f32 0.0, %v1187
        %1189 = vdwg.mxu0
        %v1190 = vadd.f32 %v1038, %v1143
        %v1191 = vadd.f32 %v1039, %v1146
        %v1192 = vadd.f32 %v1040, %v1149
        %v1193 = vadd.f32 %v1041, %v1152
        %v1194 = vadd.f32 %v1042, %v1155
        %v1195 = vadd.f32 %v1043, %v1158
        %v1196 = vadd.f32 %v1044, %v1161
        %v1197 = vadd.f32 %v1045, %v1164
        %v1198 = vadd.f32 %v1046, %v1167
        %v1199 = vadd.f32 %v1047, %v1170
        %v1200 = vadd.f32 %v1048, %v1173
        %v1201 = vadd.f32 %v1049, %v1176
        %v1202 = vadd.f32 %v1050, %v1179
        %v1203 = vadd.f32 %v1051, %v1182
        %v1204 = vadd.f32 %v1052, %v1185
        %v1205 = vadd.f32 %v1053, %v1188
        %v1206 = vld [vmem:[%s1056 + $0x1] sm:$0xff]
        %v1207 = vld [vmem:[%s1056 + $0x9] sm:$0xff]
        %v1208 = vld [vmem:[%s1056 + $0x19] sm:$0xff]
        %v1209 = vld [vmem:[%s1056 + $0x21] sm:$0xff]
        %v1210 = vld [vmem:[%s1056 + $0x31] sm:$0xff]
        %v1211 = vld [vmem:[%s1056 + $0x39] sm:$0xff]
        %v1212 = vld [vmem:[%s1056 + $0x49] sm:$0xff]
        %v1213 = vld [vmem:[%s1056 + $0x51] sm:$0xff]
        %v1214 = vld [vmem:[%s1056 + $0x61] sm:$0xff]
        %v1215 = vld [vmem:[%s1056 + $0x69] sm:$0xff]
        %v1216 = vld [vmem:[%s1056 + $0x79] sm:$0xff]
        %v1217 = vld [vmem:[%s1056 + $0x81] sm:$0xff]
        %v1218 = vld [vmem:[%s1056 + $0x91] sm:$0xff]
        %v1219 = vld [vmem:[%s1056 + $0x99] sm:$0xff]
        %v1220 = vld [vmem:[%s1056 + $0xa9] sm:$0xff]
        %v1221 = vld [vmem:[%s1056 + $0xb1] sm:$0xff]
        %v1222 = vld [vmem:[%s1 + $0x1c] sm:$0xf]
        %v1224 = vsel %vm221, %v1206, 0
        %v1227 = vsel %vm221, %v1207, 0
        %v1230 = vsel %vm221, %v1208, 0
        %v1233 = vsel %vm221, %v1209, 0
        %v1236 = vsel %vm221, %v1210, 0
        %v1239 = vsel %vm221, %v1211, 0
        %v1242 = vsel %vm221, %v1212, 0
        %v1245 = vsel %vm221, %v1213, 0
        %v1248 = vsel %vm221, %v1214, 0
        %v1251 = vsel %vm221, %v1215, 0
        %v1254 = vsel %vm221, %v1216, 0
        %v1257 = vsel %vm221, %v1217, 0
        %v1260 = vsel %vm221, %v1218, 0
        %v1263 = vsel %vm221, %v1219, 0
        %v1266 = vsel %vm221, %v1220, 0
        %v1269 = vsel %vm221, %v1221, 0
        %v1272 = vsel %vm270, %v1222, 0
        %1274 = vmatpush.msra.mxu0 0.0
        %1275 = vmatpush.msra.mxu0 0.0
        %1276 = vmatpush.msra.mxu0 0.0
        %1277 = vmatpush.msra.mxu0 0.0
        %1278 = vmatpush.msra.mxu0 0.0
        %1279 = vmatpush.msra.mxu0 0.0
        %1280 = vmatpush.msra.mxu0 0.0
        %1281 = vmatpush.msra.mxu0 0.0
        %1282 = vmatpush.msra.mxu0 0.0
        %1283 = vmatpush.msra.mxu0 0.0
        %1284 = vmatpush.msra.mxu0 0.0
        %1285 = vmatpush.msra.mxu0 0.0
        %1286 = vmatpush.msra.mxu0 0.0
        %1287 = vmatpush.msra.mxu0 0.0
        %1288 = vmatpush.msra.mxu0 0.0
        %1289 = vmatpush.msra.mxu0 %v1272
        %1290 = vmatmul.f32.gmra.mxu0 %v1224
        %v1291 = vpop.f32.mrf.mxu0
        %v1292 = vadd.f32 0.0, %v1291
        %1293 = vmatmul.f32.gmra.mxu0 %v1227
        %v1294 = vpop.f32.mrf.mxu0
        %v1295 = vadd.f32 0.0, %v1294
        %1296 = vmatmul.f32.gmra.mxu0 %v1230
        %v1297 = vpop.f32.mrf.mxu0
        %v1298 = vadd.f32 0.0, %v1297
        %1299 = vmatmul.f32.gmra.mxu0 %v1233
        %v1300 = vpop.f32.mrf.mxu0
        %v1301 = vadd.f32 0.0, %v1300
        %1302 = vmatmul.f32.gmra.mxu0 %v1236
        %v1303 = vpop.f32.mrf.mxu0
        %v1304 = vadd.f32 0.0, %v1303
        %1305 = vmatmul.f32.gmra.mxu0 %v1239
        %v1306 = vpop.f32.mrf.mxu0
        %v1307 = vadd.f32 0.0, %v1306
        %1308 = vmatmul.f32.gmra.mxu0 %v1242
        %v1309 = vpop.f32.mrf.mxu0
        %v1310 = vadd.f32 0.0, %v1309
        %1311 = vmatmul.f32.gmra.mxu0 %v1245
        %v1312 = vpop.f32.mrf.mxu0
        %v1313 = vadd.f32 0.0, %v1312
        %1314 = vmatmul.f32.gmra.mxu0 %v1248
        %v1315 = vpop.f32.mrf.mxu0
        %v1316 = vadd.f32 0.0, %v1315
        %1317 = vmatmul.f32.gmra.mxu0 %v1251
        %v1318 = vpop.f32.mrf.mxu0
        %v1319 = vadd.f32 0.0, %v1318
        %1320 = vmatmul.f32.gmra.mxu0 %v1254
        %v1321 = vpop.f32.mrf.mxu0
        %v1322 = vadd.f32 0.0, %v1321
        %1323 = vmatmul.f32.gmra.mxu0 %v1257
        %v1324 = vpop.f32.mrf.mxu0
        %v1325 = vadd.f32 0.0, %v1324
        %1326 = vmatmul.f32.gmra.mxu0 %v1260
        %v1327 = vpop.f32.mrf.mxu0
        %v1328 = vadd.f32 0.0, %v1327
        %1329 = vmatmul.f32.gmra.mxu0 %v1263
        %v1330 = vpop.f32.mrf.mxu0
        %v1331 = vadd.f32 0.0, %v1330
        %1332 = vmatmul.f32.gmra.mxu0 %v1266
        %v1333 = vpop.f32.mrf.mxu0
        %v1334 = vadd.f32 0.0, %v1333
        %1335 = vmatmul.f32.gmra.mxu0 %v1269
        %v1336 = vpop.f32.mrf.mxu0
        %v1337 = vadd.f32 0.0, %v1336
        %1338 = vdwg.mxu0
        %v1339 = vadd.f32 %v1190, %v1292
        %v1340 = vadd.f32 %v1191, %v1295
        %v1341 = vadd.f32 %v1192, %v1298
        %v1342 = vadd.f32 %v1193, %v1301
        %v1343 = vadd.f32 %v1194, %v1304
        %v1344 = vadd.f32 %v1195, %v1307
        %v1345 = vadd.f32 %v1196, %v1310
        %v1346 = vadd.f32 %v1197, %v1313
        %v1347 = vadd.f32 %v1198, %v1316
        %v1348 = vadd.f32 %v1199, %v1319
        %v1349 = vadd.f32 %v1200, %v1322
        %v1350 = vadd.f32 %v1201, %v1325
        %v1351 = vadd.f32 %v1202, %v1328
        %v1352 = vadd.f32 %v1203, %v1331
        %v1353 = vadd.f32 %v1204, %v1334
        %v1354 = vadd.f32 %v1205, %v1337
        %v1355 = vld [vmem:[%s1056 + $0x2] sm:$0xff]
        %v1356 = vld [vmem:[%s1056 + $0xa] sm:$0xff]
        %v1357 = vld [vmem:[%s1056 + $0x1a] sm:$0xff]
        %v1358 = vld [vmem:[%s1056 + $0x22] sm:$0xff]
        %v1359 = vld [vmem:[%s1056 + $0x32] sm:$0xff]
        %v1360 = vld [vmem:[%s1056 + $0x3a] sm:$0xff]
        %v1361 = vld [vmem:[%s1056 + $0x4a] sm:$0xff]
        %v1362 = vld [vmem:[%s1056 + $0x52] sm:$0xff]
        %v1363 = vld [vmem:[%s1056 + $0x62] sm:$0xff]
        %v1364 = vld [vmem:[%s1056 + $0x6a] sm:$0xff]
        %v1365 = vld [vmem:[%s1056 + $0x7a] sm:$0xff]
        %v1366 = vld [vmem:[%s1056 + $0x82] sm:$0xff]
        %v1367 = vld [vmem:[%s1056 + $0x92] sm:$0xff]
        %v1368 = vld [vmem:[%s1056 + $0x9a] sm:$0xff]
        %v1369 = vld [vmem:[%s1056 + $0xaa] sm:$0xff]
        %v1370 = vld [vmem:[%s1056 + $0xb2] sm:$0xff]
        %v1371 = vld [vmem:[%s1 + $0x20] sm:$0xf]
        %v1373 = vsel %vm221, %v1355, 0
        %v1376 = vsel %vm221, %v1356, 0
        %v1379 = vsel %vm221, %v1357, 0
        %v1382 = vsel %vm221, %v1358, 0
        %v1385 = vsel %vm221, %v1359, 0
        %v1388 = vsel %vm221, %v1360, 0
        %v1391 = vsel %vm221, %v1361, 0
        %v1394 = vsel %vm221, %v1362, 0
        %v1397 = vsel %vm221, %v1363, 0
        %v1400 = vsel %vm221, %v1364, 0
        %v1403 = vsel %vm221, %v1365, 0
        %v1406 = vsel %vm221, %v1366, 0
        %v1409 = vsel %vm221, %v1367, 0
        %v1412 = vsel %vm221, %v1368, 0
        %v1415 = vsel %vm221, %v1369, 0
        %v1418 = vsel %vm221, %v1370, 0
        %v1421 = vsel %vm270, %v1371, 0
        %1423 = vmatpush.msra.mxu0 0.0
        %1424 = vmatpush.msra.mxu0 0.0
        %1425 = vmatpush.msra.mxu0 0.0
        %1426 = vmatpush.msra.mxu0 0.0
        %1427 = vmatpush.msra.mxu0 0.0
        %1428 = vmatpush.msra.mxu0 0.0
        %1429 = vmatpush.msra.mxu0 0.0
        %1430 = vmatpush.msra.mxu0 0.0
        %1431 = vmatpush.msra.mxu0 0.0
        %1432 = vmatpush.msra.mxu0 0.0
        %1433 = vmatpush.msra.mxu0 0.0
        %1434 = vmatpush.msra.mxu0 0.0
        %1435 = vmatpush.msra.mxu0 0.0
        %1436 = vmatpush.msra.mxu0 0.0
        %1437 = vmatpush.msra.mxu0 0.0
        %1438 = vmatpush.msra.mxu0 %v1421
        %1439 = vmatmul.f32.gmra.mxu0 %v1373
        %v1440 = vpop.f32.mrf.mxu0
        %v1441 = vadd.f32 0.0, %v1440
        %1442 = vmatmul.f32.gmra.mxu0 %v1376
        %v1443 = vpop.f32.mrf.mxu0
        %v1444 = vadd.f32 0.0, %v1443
        %1445 = vmatmul.f32.gmra.mxu0 %v1379
        %v1446 = vpop.f32.mrf.mxu0
        %v1447 = vadd.f32 0.0, %v1446
        %1448 = vmatmul.f32.gmra.mxu0 %v1382
        %v1449 = vpop.f32.mrf.mxu0
        %v1450 = vadd.f32 0.0, %v1449
        %1451 = vmatmul.f32.gmra.mxu0 %v1385
        %v1452 = vpop.f32.mrf.mxu0
        %v1453 = vadd.f32 0.0, %v1452
        %1454 = vmatmul.f32.gmra.mxu0 %v1388
        %v1455 = vpop.f32.mrf.mxu0
        %v1456 = vadd.f32 0.0, %v1455
        %1457 = vmatmul.f32.gmra.mxu0 %v1391
        %v1458 = vpop.f32.mrf.mxu0
        %v1459 = vadd.f32 0.0, %v1458
        %1460 = vmatmul.f32.gmra.mxu0 %v1394
        %v1461 = vpop.f32.mrf.mxu0
        %v1462 = vadd.f32 0.0, %v1461
        %1463 = vmatmul.f32.gmra.mxu0 %v1397
        %v1464 = vpop.f32.mrf.mxu0
        %v1465 = vadd.f32 0.0, %v1464
        %1466 = vmatmul.f32.gmra.mxu0 %v1400
        %v1467 = vpop.f32.mrf.mxu0
        %v1468 = vadd.f32 0.0, %v1467
        %1469 = vmatmul.f32.gmra.mxu0 %v1403
        %v1470 = vpop.f32.mrf.mxu0
        %v1471 = vadd.f32 0.0, %v1470
        %1472 = vmatmul.f32.gmra.mxu0 %v1406
        %v1473 = vpop.f32.mrf.mxu0
        %v1474 = vadd.f32 0.0, %v1473
        %1475 = vmatmul.f32.gmra.mxu0 %v1409
        %v1476 = vpop.f32.mrf.mxu0
        %v1477 = vadd.f32 0.0, %v1476
        %1478 = vmatmul.f32.gmra.mxu0 %v1412
        %v1479 = vpop.f32.mrf.mxu0
        %v1480 = vadd.f32 0.0, %v1479
        %1481 = vmatmul.f32.gmra.mxu0 %v1415
        %v1482 = vpop.f32.mrf.mxu0
        %v1483 = vadd.f32 0.0, %v1482
        %1484 = vmatmul.f32.gmra.mxu0 %v1418
        %v1485 = vpop.f32.mrf.mxu0
        %v1486 = vadd.f32 0.0, %v1485
        %1487 = vdwg.mxu0
        %v1488 = vadd.f32 %v1339, %v1441
        %v1489 = vadd.f32 %v1340, %v1444
        %v1490 = vadd.f32 %v1341, %v1447
        %v1491 = vadd.f32 %v1342, %v1450
        %v1492 = vadd.f32 %v1343, %v1453
        %v1493 = vadd.f32 %v1344, %v1456
        %v1494 = vadd.f32 %v1345, %v1459
        %v1495 = vadd.f32 %v1346, %v1462
        %v1496 = vadd.f32 %v1347, %v1465
        %v1497 = vadd.f32 %v1348, %v1468
        %v1498 = vadd.f32 %v1349, %v1471
        %v1499 = vadd.f32 %v1350, %v1474
        %v1500 = vadd.f32 %v1351, %v1477
        %v1501 = vadd.f32 %v1352, %v1480
        %v1502 = vadd.f32 %v1353, %v1483
        %v1503 = vadd.f32 %v1354, %v1486
        %v1504 = vld [vmem:[%s2] sm:$0x1]
        %v1506 = vperm.slane %v1504, 0
        %v1508 = vadd.f32 %v1488, %v1506
        %v1509 = vadd.f32 %v1489, %v1506
        %v1510 = vadd.f32 %v1490, %v1506
        %v1511 = vadd.f32 %v1491, %v1506
        %v1512 = vadd.f32 %v1492, %v1506
        %v1513 = vadd.f32 %v1493, %v1506
        %v1514 = vadd.f32 %v1494, %v1506
        %v1515 = vadd.f32 %v1495, %v1506
        %v1516 = vadd.f32 %v1496, %v1506
        %v1517 = vadd.f32 %v1497, %v1506
        %v1518 = vadd.f32 %v1498, %v1506
        %v1519 = vadd.f32 %v1499, %v1506
        %v1520 = vadd.f32 %v1500, %v1506
        %v1521 = vadd.f32 %v1501, %v1506
        %v1522 = vadd.f32 %v1502, %v1506
        %v1523 = vadd.f32 %v1503, %v1506
        %1524 = vst [vmem:[%s177] sm:$0xff] %v1508
        %1525 = vst [vmem:[%s177 + $0x8] sm:$0xff] %v1509
        %1526 = vst [vmem:[%s177 + $0x10] sm:$0xff] %v1510
        %1527 = vst [vmem:[%s177 + $0x18] sm:$0xff] %v1511
        %1528 = vst [vmem:[%s177 + $0x20] sm:$0xff] %v1512
        %1529 = vst [vmem:[%s177 + $0x28] sm:$0xff] %v1513
        %1530 = vst [vmem:[%s177 + $0x30] sm:$0xff] %v1514
        %1531 = vst [vmem:[%s177 + $0x38] sm:$0xff] %v1515
        %1532 = vst [vmem:[%s177 + $0x40] sm:$0xff] %v1516
        %1533 = vst [vmem:[%s177 + $0x48] sm:$0xff] %v1517
        %1534 = vst [vmem:[%s177 + $0x50] sm:$0xff] %v1518
        %1535 = vst [vmem:[%s177 + $0x58] sm:$0xff] %v1519
        %1536 = vst [vmem:[%s177 + $0x60] sm:$0xff] %v1520
        %1537 = vst [vmem:[%s177 + $0x68] sm:$0xff] %v1521
        %1538 = vst [vmem:[%s177 + $0x70] sm:$0xff] %v1522
        %1539 = vst [vmem:[%s177 + $0x78] sm:$0xff] %v1523
        %s1540 = sand.u32 %s107, 1
        %s1541 = scalar_lea.sflag [#allocation3], %s1540
        %s1542 = sand.u32 %s107, 1
        %s1543 = smul.addr %s1542, 128
        %s1544 = scalar_lea.vmem [#allocation2], %s1543
        // Predicated region
        $region33: #{tpu_custom_call.1} parent=31 // pred_check
          %p1545 = pneg %p117
        $region34: #{tpu_custom_call.1} parent=31 // pred_check_branch
          %1547 = sbr.rel (%p1545) target = $region36
        $region35: #{tpu_custom_call.1} parent=31 // pred_region
          %s1548 = smul.u32 8, %s22
          %1550 = vsyncadd %s1541, 0
          %s1551 = smul.addr %s1548, 2
          %s1552 = smul.addr %s21, 32
          %s1553 = sadd.s32 %s1551, %s1552
          %s1554 = smul.addr %s1553, 8
          %s1555 = scalar_lea.hbm %s3, %s1554
          %s1556 = sshll.u32 %s1544, 4
          %s1557 = int_to_ptr.vmem [resolvable:$true] %s1556
          %s1558 = sshll.u32 %s1555, 4
          %s1559 = int_to_ptr.hbm [resolvable:$true] %s1558
          %1564 = dma.vmem_to_hbm [thread:$0]  %s1557, 2048, %s1559, %s1541, 128, 128, 8
        $region36: #{tpu_custom_call.1} parent=31 // pred_fallthru
          _
      $region32: #{tpu_custom_call.1} parent=5 // pred_fallthru
        _
      %p1565 = scmp.le.s32.totalorder 2, %s12
      // Predicated region
      $region37: #{tpu_custom_call.1} parent=5 // pred_check
        %p1566 = pneg %p1565
      $region38: #{tpu_custom_call.1} parent=5 // pred_check_branch
        %1568 = sbr.rel (%p1566) target = $region40
      $region39: #{tpu_custom_call.1} parent=5 // pred_region
        %s1569 = ssub.s32 %s12, 2
        // Predicated region
        $region41: #{tpu_custom_call.1} parent=39 // pred_check
          %p1570 = pneg %p123
        $region42: #{tpu_custom_call.1} parent=39 // pred_check_branch
          %1572 = sbr.rel (%p1570) target = $region44
        $region43: #{tpu_custom_call.1} parent=39 // pred_region
          %s1573 = sand.u32 %s108, 1
          %s1574 = scalar_lea.sflag [#allocation3], %s1573
          %s1575 = sand.u32 %s108, 1
          %s1576 = smul.addr %s1575, 128
          %s1577 = scalar_lea.vmem [#allocation2], %s1576
          %1579 = dma.done %s1574, 2048
        $region44: #{tpu_custom_call.1} parent=39 // pred_fallthru
          _
      $region40: #{tpu_custom_call.1} parent=5 // pred_fallthru
        _
    $region6: #{tpu_custom_call.1} parent=1 // loop_footer
      %s16 = sadd.s32 1, %s12
    $region7: #{tpu_custom_call.1} parent=1 // loop_footer_branch
      %11 = sbr.rel target = $region3
    $region8: #{tpu_custom_call.1} parent=1 // loop_exit
      _
    %1580 = vsyncpa [#allocation3], 1
    %s1581 = scalar_lea.sflag [#allocation3], 1
    %1582 = vsyncpa %s1581, 1

</llo_original>
